<compile_context>
chip_gen: v7x
topology: tpu7x:2x2x1
jax: 0.10.0
libtpu: 0.0.40
codegen_flags: <defaults>
</compile_context>

<pallas_src>
import functools

import jax
import jax.numpy as jnp
from jax.experimental import pallas as pl
from jax.experimental.pallas import tpu as pltpu


def _elu(x):
    # F.elu with alpha=1.0 (only exponentiate the negative side)
    return jnp.where(x > 0, x, jnp.exp(jnp.minimum(x, 0.0)) - 1.0)


# ----------------------------------------------------------------------------
# Single fused kernel: NNConv(mean)+ELU x2, global_mean_pool, fc1+ELU, fc2,
# log_softmax.  Graph gather/scatter/pool is binary-matrix MXU work; mean
# scales (1/deg, 1/|graph|) are separate f32 VPU multiplies.  All small
# parameters arrive in a few packed slabs and are unpacked via static slices.
# ----------------------------------------------------------------------------
def net_kernel(x_ref, svec_ref, gp_ref, sdst_ref, s64_ref, s576_ref, s16_ref,
               s32_ref, sc_ref, out_ref, *, E, N, G, FIN, F1, F2, HID, C, EH):
    f32 = jnp.float32
    K1, K2 = FIN * F1, F1 * F2

    x = x_ref[...]                                          # [N, FIN] f32

    # scalar-column slab: edge_attr | 1/deg | 1/|graph|
    eattr = svec_ref[0:E, :]                                # [E, 1]
    inv_deg = svec_ref[E:E + N, :]                          # [N, 1]
    inv_cnt = svec_ref[E + N:E + N + G, :]                  # [G, 1]

    # binary glue (bf16 0/1 in HBM, exact); upcast once in VMEM
    gsrc = gp_ref[0:E, :].astype(f32)                       # [E, N] one-hot source gather
    pool = gp_ref[E:E + G, :].astype(f32)                   # [G, N] graph membership
    sdst = sdst_ref[...].astype(f32)                        # [N, E] target scatter

    # ---- packed parameter slabs (static row/col slices) ----
    wfc1 = s64_ref[0:F2, 0:HID]                             # [32, 64]
    ra = s64_ref[F2:F2 + FIN, 0:K1]                         # [4, 64]   repeat matrix conv1
    bfc1 = s64_ref[F2 + FIN:F2 + FIN + 1, 0:HID]            # [1, 64]
    w1cat = s64_ref[F2 + FIN + 1:F2 + FIN + 2, 0:2 * EH]    # [1, 20]   (conv2 | conv1)
    b1cat = s64_ref[F2 + FIN + 2:F2 + FIN + 3, 0:2 * EH]    # [1, 20]

    rb_off = -(-(2 * EH + 1) // 8) * 8                      # 8-aligned row offset (=24)
    w2bd = s576_ref[0:2 * EH, :]                            # [20, 576] block-diag (conv2|conv1)
    b2cat = s576_ref[2 * EH:2 * EH + 1, :]                  # [1, 576]
    rb = s576_ref[rb_off:rb_off + F1, 0:K2]                 # [16, 512] repeat matrix conv2

    sa = s16_ref[0:K1, :]                                   # [64, 16]  block-sum conv1
    root_a = s16_ref[K1:K1 + FIN, :]                        # [4, 16]
    bias_a = s16_ref[K1 + FIN:K1 + FIN + 1, :]              # [1, 16]

    sb = s32_ref[0:K2, :]                                   # [512, 32] block-sum conv2
    root_b = s32_ref[K2:K2 + F1, :]                         # [16, 32]
    bias_b = s32_ref[K2 + F1:K2 + F1 + 1, :]                # [1, 32]

    wfc2 = sc_ref[0:HID, :]                                 # [64, C]
    bfc2 = sc_ref[HID:HID + 1, :]                           # [1, C]

    # ---- hoisted edge MLP for BOTH conv layers (depends only on edge_attr) ----
    eh = jnp.maximum(eattr * w1cat + b1cat, 0.0)                        # [E, 20]
    wedge_cat = jnp.dot(eh, w2bd, preferred_element_type=f32) + b2cat   # [E, 576]
    wedge_b = wedge_cat[:, 0:K2]                                        # [E, 512] lane-aligned
    wedge_a = wedge_cat[:, K2:K2 + K1]                                  # [E, 64]  starts at 512

    def nnconv_elu(h_in, wedge, rmat, smat, root, bias):
        # gather x_j = x[edge_index[0]] as a one-hot matmul (MXU)
        x_src = jnp.dot(gsrc, h_in, preferred_element_type=f32)              # [E, Fin]
        # per-edge matvec via lane-aligned repeat / block-sum matmuls
        x_rep = jnp.dot(x_src, rmat, preferred_element_type=f32)             # [E, Fin*Fout]
        msg = jnp.dot(x_rep * wedge, smat, preferred_element_type=f32)       # [E, Fout]
        # mean aggregation: binary scatter matmul then exact f32 1/deg scaling
        aggr = inv_deg * jnp.dot(sdst, msg, preferred_element_type=f32)      # [N, Fout]
        return _elu(aggr + jnp.dot(h_in, root, preferred_element_type=f32) + bias)

    h1 = nnconv_elu(x, wedge_a, ra, sa, root_a, bias_a)                 # [N, 16]
    h2 = nnconv_elu(h1, wedge_b, rb, sb, root_b, bias_b)                # [N, 32]

    # global_mean_pool + fc1/ELU + fc2 + log_softmax
    pooled = inv_cnt * jnp.dot(pool, h2, preferred_element_type=f32)    # [G, 32]
    z = _elu(jnp.dot(pooled, wfc1, preferred_element_type=f32) + bfc1)  # [G, 64]
    logits = jnp.dot(z, wfc2, preferred_element_type=f32) + bfc2        # [G, C]
    m = jnp.max(logits, axis=1, keepdims=True)
    lse = jnp.log(jnp.sum(jnp.exp(logits - m), axis=1, keepdims=True))
    out_ref[...] = logits - m - lse


# ----------------------------------------------------------------------------
# Wrapper: pack operands into a few slabs, size VMEM, call pallas_call.
# ----------------------------------------------------------------------------
def _padcols(a, width):
    return jnp.pad(a, ((0, 0), (0, width - a.shape[1])))


def _vmem_padded_bytes(a):
    sub = 16 if a.dtype == jnp.bfloat16 else 8
    r = -(-a.shape[0] // sub) * sub
    c = -(-a.shape[1] // 128) * 128
    return r * c * a.dtype.itemsize


def net_forward(x, eattr, gsrc_b, sdst_b, inv_deg, pool_b, inv_cnt, p1, p2, head):
    N, FIN = x.shape
    E = eattr.shape[0]
    G = pool_b.shape[0]
    F1 = p1[6].shape[1]            # conv1 root: [FIN, 16]
    F2 = p2[6].shape[1]            # conv2 root: [16, 32]
    HID = head[0].shape[1]         # fc1: 64
    C = head[2].shape[1]           # num_classes
    EH = p1[0].shape[1]            # edge-MLP hidden: 10
    K1, K2 = FIN * F1, F1 * F2
    f32 = jnp.float32

    (w1a, b1a, w2a, b2a, Ra, Sa, root_a, bias_a) = p1
    (w1b, b1b, w2b, b2b, Rb, Sb, root_b, bias_b) = p2
    (wfc1, bfc1, wfc2, bfc2) = head

    # -- merged edge MLP (conv2 block FIRST so in-kernel slices are 128-lane aligned) --
    w1cat = jnp.concatenate([w1b, w1a], axis=1)                          # [1, 2*EH]
    b1cat = jnp.concatenate([b1b, b1a], axis=1)                          # [1, 2*EH]
    w2bd = jnp.zeros((2 * EH, K2 + K1), f32)
    w2bd = w2bd.at[0:EH, 0:K2].set(w2b).at[EH:2 * EH, K2:K2 + K1].set(w2a)
    b2cat = jnp.concatenate([b2b, b2a], axis=1)                          # [1, K2+K1]

    # -- packed operand slabs --
    svec = jnp.concatenate([eattr, inv_deg, inv_cnt], axis=0)            # [E+N+G, 1] f32
    gp_b = jnp.concatenate([gsrc_b, pool_b], axis=0)                     # [E+G, N]  bf16

    w64 = max(HID, K1, 2 * EH)
    slab64 = jnp.concatenate(
        [_padcols(wfc1, w64), _padcols(Ra, w64), _padcols(bfc1, w64),
         _padcols(w1cat, w64), _padcols(b1cat, w64)], axis=0)            # [F2+FIN+3, 64]

    rb_off = -(-(2 * EH + 1) // 8) * 8                                   # 8-aligned (=24)
    padrows = jnp.zeros((rb_off - (2 * EH + 1), K2 + K1), f32)
    slab576 = jnp.concatenate(
        [w2bd, b2cat, padrows, _padcols(Rb, K2 + K1)], axis=0)           # [rb_off+F1, 576]

    slab16 = jnp.concatenate([Sa, root_a, bias_a], axis=0)               # [K1+FIN+1, 16]
    slab32 = jnp.concatenate([Sb, root_b, bias_b], axis=0)               # [K2+F1+1, 32]
    slabC = jnp.concatenate([wfc2, bfc2], axis=0)                        # [HID+1, C]

    args = (x, svec, gp_b, sdst_b, slab64, slab576, slab16, slab32, slabC)

    # -- advisory cost estimate for XLA's scheduler --
    def conv_flops(f_in, f_out):
        k = f_in * f_out
        return (2 * E * N * f_in + 2 * E * f_in * k + E * k
                + 2 * E * k * f_out + 2 * N * E * f_out + 2 * N * f_in * f_out)

    flops = (2 * E * (2 * EH) + 2 * E * (2 * EH) * (K1 + K2)
             + conv_flops(FIN, F1) + conv_flops(F1, F2)
             + 2 * G * N * F2 + 2 * G * F2 * HID + 2 * G * HID * C)
    transcendentals = N * (F1 + F2) + G * (HID + C)
    bytes_accessed = int(sum(int(a.size) * a.dtype.itemsize for a in args)) + G * C * 4

    # -- VMEM budget: actual padded footprint + headroom (not a blanket 32 MiB) --
    out_bytes = _vmem_padded_bytes(jnp.zeros((G, C), f32))
    footprint = sum(_vmem_padded_bytes(a) for a in args) + out_bytes
    vmem_limit = int(max(4 * 1024 * 1024, 4 * footprint))

    kernel = functools.partial(net_kernel, E=E, N=N, G=G, FIN=FIN, F1=F1, F2=F2,
                               HID=HID, C=C, EH=EH)

    return pl.pallas_call(
        kernel,
        out_shape=jax.ShapeDtypeStruct((G, C), f32),
        in_specs=[pl.BlockSpec(memory_space=pltpu.MemorySpace.VMEM)] * len(args),
        out_specs=pl.BlockSpec(memory_space=pltpu.MemorySpace.VMEM),
        compiler_params=pltpu.CompilerParams(vmem_limit_bytes=vmem_limit),
        cost_estimate=pl.CostEstimate(flops=int(flops),
                                      transcendentals=int(transcendentals),
                                      bytes_accessed=int(bytes_accessed)),
    )(*args)


# ----------------------------------------------------------------------------
# Pure-JAX reference (per-layer edge MLP, einsum message, f32 HIGHEST).
# ----------------------------------------------------------------------------
def ref_forward(x, eattr, gsrc_b, sdst_b, inv_deg, pool_b, inv_cnt, p1, p2, head):
    hp = jax.lax.Precision.HIGHEST
    gsrc = gsrc_b.astype(jnp.float32)
    sdst = sdst_b.astype(jnp.float32)
    pool = pool_b.astype(jnp.float32)

    def layer(h, params):
        w1, b1, w2, b2, _R, _S, root, bias = params
        f_in, f_out = root.shape
        eh = jnp.maximum(eattr * w1 + b1, 0.0)
        wedge = jnp.dot(eh, w2, precision=hp) + b2
        xs = jnp.dot(gsrc, h, precision=hp)
        msg = jnp.einsum('ei,eio->eo', xs, wedge.reshape(-1, f_in, f_out), precision=hp)
        out = inv_deg * jnp.dot(sdst, msg, precision=hp) + jnp.dot(h, root, precision=hp) + bias
        return _elu(out)

    h = layer(x, p1)
    h = layer(h, p2)
    wfc1, bfc1, wfc2, bfc2 = head
    pooled = inv_cnt * jnp.dot(pool, h, precision=hp)
    z = _elu(jnp.dot(pooled, wfc1, precision=hp) + bfc1)
    logits = jnp.dot(z, wfc2, precision=hp) + bfc2
    return jax.nn.log_softmax(logits, axis=1)


# ----------------------------------------------------------------------------
# Parameter construction (deterministic).
# ----------------------------------------------------------------------------
def make_nnconv_params(key, f_in, f_out, hidden=10):
    ks = jax.random.split(key, 6)
    s = 0.2
    w1 = s * jax.random.normal(ks[0], (1, hidden), jnp.float32)
    b1 = s * jax.random.normal(ks[1], (1, hidden), jnp.float32)
    w2 = s * jax.random.normal(ks[2], (hidden, f_in * f_out), jnp.float32)
    b2 = s * jax.random.normal(ks[3], (1, f_in * f_out), jnp.float32)
    root = s * jax.random.normal(ks[4], (f_in, f_out), jnp.float32)
    bias = s * jax.random.normal(ks[5], (1, f_out), jnp.float32)
    # lane-aligned repeat / block-sum matrices for the per-edge matvec (exact 0/1)
    R = jnp.kron(jnp.eye(f_in, dtype=jnp.float32), jnp.ones((1, f_out), jnp.float32))
    S = jnp.kron(jnp.ones((f_in, 1), jnp.float32), jnp.eye(f_out, dtype=jnp.float32))
    return (w1, b1, w2, b2, R, S, root, bias)


if __name__ == "__main__":
    key = jax.random.PRNGKey(0)
    num_features, num_classes = 4, 3
    num_graphs, nodes_per_graph = 2, 8
    N = num_graphs * nodes_per_graph

    # bidirectional ring per graph
    src, dst = [], []
    for g in range(num_graphs):
        off = g * nodes_per_graph
        for i in range(nodes_per_graph):
            j = (i + 1) % nodes_per_graph
            src += [off + i, off + j]
            dst += [off + j, off + i]
    src = jnp.array(src, jnp.int32)
    dst = jnp.array(dst, jnp.int32)
    E = int(src.shape[0])
    batch = jnp.repeat(jnp.arange(num_graphs, dtype=jnp.int32), nodes_per_graph)

    keys = jax.random.split(key, 8)
    x = jax.random.normal(keys[0], (N, num_features), jnp.float32)
    edge_attr = jax.random.normal(keys[1], (E, 1), jnp.float32)

    # binary gather / scatter / pool matrices in bf16 (0/1 exact); mean scales in f32
    gsrc = jnp.zeros((E, N), jnp.float32).at[jnp.arange(E), src].set(1.0).astype(jnp.bfloat16)
    sdst = jnp.zeros((N, E), jnp.float32).at[dst, jnp.arange(E)].set(1.0).astype(jnp.bfloat16)
    deg = jnp.zeros((N,), jnp.float32).at[dst].add(1.0)
    inv_deg = (1.0 / jnp.maximum(deg, 1.0)).reshape(N, 1)        # PyG: isolated nodes -> 0 aggr
    pool = jnp.zeros((num_graphs, N), jnp.float32).at[batch, jnp.arange(N)].set(1.0).astype(jnp.bfloat16)
    counts = jnp.zeros((num_graphs,), jnp.float32).at[batch].add(1.0)
    inv_cnt = (1.0 / jnp.maximum(counts, 1.0)).reshape(num_graphs, 1)

    # parameters
    p1 = make_nnconv_params(keys[2], num_features, 16)   # conv1: num_features -> 16
    p2 = make_nnconv_params(keys[3], 16, 32)             # conv2: 16 -> 32
    wfc1 = 0.2 * jax.random.normal(keys[4], (32, 64), jnp.float32)
    bfc1 = 0.2 * jax.random.normal(keys[5], (1, 64), jnp.float32)
    wfc2 = 0.2 * jax.random.normal(keys[6], (64, num_classes), jnp.float32)
    bfc2 = 0.2 * jax.random.normal(keys[7], (1, num_classes), jnp.float32)
    head = (wfc1, bfc1, wfc2, bfc2)

    out = net_forward(x, edge_attr, gsrc, sdst, inv_deg, pool, inv_cnt, p1, p2, head)
    out = jax.block_until_ready(out)

    ref = jax.block_until_ready(
        ref_forward(x, edge_attr, gsrc, sdst, inv_deg, pool, inv_cnt, p1, p2, head))

    assert out.shape == (num_graphs, num_classes)
    assert bool(jnp.all(jnp.isfinite(out)))
    assert bool(jnp.allclose(out, ref, atol=1e-3, rtol=1e-3)), (out, ref)
    # rows of log_softmax must exp-sum to 1
    assert bool(jnp.allclose(jnp.sum(jnp.exp(out), axis=1), 1.0, atol=1e-4))

    print("KERNEL_OK")
</pallas_src>

<mosaic_0001>
module attributes {stable_mosaic.version = 11 : i64} {
  func.func @net_kernel(%arg0: memref<16x4xf32, #tpu.memory_space<vmem>>, %arg1: memref<50x1xf32, #tpu.memory_space<vmem>>, %arg2: memref<34x16xbf16, #tpu.memory_space<vmem>>, %arg3: memref<16x32xbf16, #tpu.memory_space<vmem>>, %arg4: memref<39x64xf32, #tpu.memory_space<vmem>>, %arg5: memref<40x576xf32, #tpu.memory_space<vmem>>, %arg6: memref<69x16xf32, #tpu.memory_space<vmem>>, %arg7: memref<529x32xf32, #tpu.memory_space<vmem>>, %arg8: memref<65x3xf32, #tpu.memory_space<vmem>>, %arg9: memref<2x3xf32, #tpu.memory_space<vmem>>) attributes {dimension_semantics = [], scalar_prefetch = 0 : i64, scratch_operands = 0 : i64, tpu.core_type = #tpu.core_type<tc>} {
    %c0 = arith.constant 0 : index
    %c0_0 = arith.constant 0 : index
    %0 = vector.load %arg0[%c0, %c0_0] : memref<16x4xf32, #tpu.memory_space<vmem>>, vector<16x4xf32>
    %c0_1 = arith.constant 0 : index
    %c0_2 = arith.constant 0 : index
    %1 = vector.load %arg1[%c0_1, %c0_2] : memref<50x1xf32, #tpu.memory_space<vmem>>, vector<32x1xf32>
    %c32 = arith.constant 32 : index
    %c0_3 = arith.constant 0 : index
    %2 = vector.load %arg1[%c32, %c0_3] : memref<50x1xf32, #tpu.memory_space<vmem>>, vector<16x1xf32>
    %c48 = arith.constant 48 : index
    %c0_4 = arith.constant 0 : index
    %3 = vector.load %arg1[%c48, %c0_4] : memref<50x1xf32, #tpu.memory_space<vmem>>, vector<2x1xf32>
    %c0_5 = arith.constant 0 : index
    %c0_6 = arith.constant 0 : index
    %4 = vector.load %arg2[%c0_5, %c0_6] : memref<34x16xbf16, #tpu.memory_space<vmem>>, vector<32x16xbf16>
    %5 = arith.extf %4 : vector<32x16xbf16> to vector<32x16xf32>
    %c32_7 = arith.constant 32 : index
    %c0_8 = arith.constant 0 : index
    %6 = vector.load %arg2[%c32_7, %c0_8] : memref<34x16xbf16, #tpu.memory_space<vmem>>, vector<2x16xbf16>
    %7 = arith.extf %6 : vector<2x16xbf16> to vector<2x16xf32>
    %c0_9 = arith.constant 0 : index
    %c0_10 = arith.constant 0 : index
    %8 = vector.load %arg3[%c0_9, %c0_10] : memref<16x32xbf16, #tpu.memory_space<vmem>>, vector<16x32xbf16>
    %9 = arith.extf %8 : vector<16x32xbf16> to vector<16x32xf32>
    %c0_11 = arith.constant 0 : index
    %c0_12 = arith.constant 0 : index
    %10 = vector.load %arg4[%c0_11, %c0_12] : memref<39x64xf32, #tpu.memory_space<vmem>>, vector<32x64xf32>
    %c32_13 = arith.constant 32 : index
    %c0_14 = arith.constant 0 : index
    %11 = vector.load %arg4[%c32_13, %c0_14] : memref<39x64xf32, #tpu.memory_space<vmem>>, vector<4x64xf32>
    %c36 = arith.constant 36 : index
    %c0_15 = arith.constant 0 : index
    %12 = vector.load %arg4[%c36, %c0_15] : memref<39x64xf32, #tpu.memory_space<vmem>>, vector<1x64xf32>
    %c37 = arith.constant 37 : index
    %c0_16 = arith.constant 0 : index
    %13 = vector.load %arg4[%c37, %c0_16] : memref<39x64xf32, #tpu.memory_space<vmem>>, vector<1x20xf32>
    %c38 = arith.constant 38 : index
    %c0_17 = arith.constant 0 : index
    %14 = vector.load %arg4[%c38, %c0_17] : memref<39x64xf32, #tpu.memory_space<vmem>>, vector<1x20xf32>
    %c0_18 = arith.constant 0 : index
    %c0_19 = arith.constant 0 : index
    %15 = vector.load %arg5[%c0_18, %c0_19] : memref<40x576xf32, #tpu.memory_space<vmem>>, vector<20x576xf32>
    %c20 = arith.constant 20 : index
    %c0_20 = arith.constant 0 : index
    %16 = vector.load %arg5[%c20, %c0_20] : memref<40x576xf32, #tpu.memory_space<vmem>>, vector<1x576xf32>
    %c24 = arith.constant 24 : index
    %c0_21 = arith.constant 0 : index
    %17 = vector.load %arg5[%c24, %c0_21] : memref<40x576xf32, #tpu.memory_space<vmem>>, vector<16x512xf32>
    %c0_22 = arith.constant 0 : index
    %c0_23 = arith.constant 0 : index
    %18 = vector.load %arg6[%c0_22, %c0_23] : memref<69x16xf32, #tpu.memory_space<vmem>>, vector<64x16xf32>
    %c64 = arith.constant 64 : index
    %c0_24 = arith.constant 0 : index
    %19 = vector.load %arg6[%c64, %c0_24] : memref<69x16xf32, #tpu.memory_space<vmem>>, vector<4x16xf32>
    %c68 = arith.constant 68 : index
    %c0_25 = arith.constant 0 : index
    %20 = vector.load %arg6[%c68, %c0_25] : memref<69x16xf32, #tpu.memory_space<vmem>>, vector<1x16xf32>
    %c0_26 = arith.constant 0 : index
    %c0_27 = arith.constant 0 : index
    %21 = vector.load %arg7[%c0_26, %c0_27] : memref<529x32xf32, #tpu.memory_space<vmem>>, vector<512x32xf32>
    %c512 = arith.constant 512 : index
    %c0_28 = arith.constant 0 : index
    %22 = vector.load %arg7[%c512, %c0_28] : memref<529x32xf32, #tpu.memory_space<vmem>>, vector<16x32xf32>
    %c528 = arith.constant 528 : index
    %c0_29 = arith.constant 0 : index
    %23 = vector.load %arg7[%c528, %c0_29] : memref<529x32xf32, #tpu.memory_space<vmem>>, vector<1x32xf32>
    %c0_30 = arith.constant 0 : index
    %c0_31 = arith.constant 0 : index
    %24 = vector.load %arg8[%c0_30, %c0_31] : memref<65x3xf32, #tpu.memory_space<vmem>>, vector<64x3xf32>
    %c64_32 = arith.constant 64 : index
    %c0_33 = arith.constant 0 : index
    %25 = vector.load %arg8[%c64_32, %c0_33] : memref<65x3xf32, #tpu.memory_space<vmem>>, vector<1x3xf32>
    %26 = vector.broadcast %1 : vector<32x1xf32> to vector<32x20xf32>
    %27 = vector.broadcast %13 : vector<1x20xf32> to vector<32x20xf32>
    %28 = arith.mulf %26, %27 : vector<32x20xf32>
    %29 = vector.broadcast %14 : vector<1x20xf32> to vector<32x20xf32>
    %30 = arith.addf %28, %29 : vector<32x20xf32>
    %cst = arith.constant 0.000000e+00 : f32
    %31 = vector.broadcast %cst : f32 to vector<32x20xf32>
    %32 = arith.maximumf %30, %31 : vector<32x20xf32>
    %cst_34 = arith.constant dense<0.000000e+00> : vector<32x576xf32>
    %33 = tpu.matmul %32, %15, %cst_34 {dimension_numbers = #tpu.dot_dimension_numbers<[1], [0], [0], [1], [0, 0, 1, 1], [], []>} : vector<32x20xf32>, vector<20x576xf32>, vector<32x576xf32> -> vector<32x576xf32>
    %34 = vector.broadcast %16 : vector<1x576xf32> to vector<32x576xf32>
    %35 = arith.addf %33, %34 : vector<32x576xf32>
    %36 = vector.extract_strided_slice %35 {offsets = [0, 0], sizes = [32, 512], strides = [1, 1]} : vector<32x576xf32> to vector<32x512xf32>
    %37 = vector.extract_strided_slice %35 {offsets = [0, 512], sizes = [32, 64], strides = [1, 1]} : vector<32x576xf32> to vector<32x64xf32>
    %cst_35 = arith.constant dense<0.000000e+00> : vector<32x4xf32>
    %38 = tpu.matmul %5, %0, %cst_35 {dimension_numbers = #tpu.dot_dimension_numbers<[1], [0], [0], [1], [0, 0, 1, 1], [], []>} : vector<32x16xf32>, vector<16x4xf32>, vector<32x4xf32> -> vector<32x4xf32>
    %cst_36 = arith.constant dense<0.000000e+00> : vector<32x64xf32>
    %39 = tpu.matmul %38, %11, %cst_36 {dimension_numbers = #tpu.dot_dimension_numbers<[1], [0], [0], [1], [0, 0, 1, 1], [], []>} : vector<32x4xf32>, vector<4x64xf32>, vector<32x64xf32> -> vector<32x64xf32>
    %40 = arith.mulf %39, %37 : vector<32x64xf32>
    %cst_37 = arith.constant dense<0.000000e+00> : vector<32x16xf32>
    %41 = tpu.matmul %40, %18, %cst_37 {dimension_numbers = #tpu.dot_dimension_numbers<[1], [0], [0], [1], [0, 0, 1, 1], [], []>} : vector<32x64xf32>, vector<64x16xf32>, vector<32x16xf32> -> vector<32x16xf32>
    %cst_38 = arith.constant dense<0.000000e+00> : vector<16x16xf32>
    %42 = tpu.matmul %9, %41, %cst_38 {dimension_numbers = #tpu.dot_dimension_numbers<[1], [0], [0], [1], [0, 0, 1, 1], [], []>} : vector<16x32xf32>, vector<32x16xf32>, vector<16x16xf32> -> vector<16x16xf32>
    %43 = vector.broadcast %2 : vector<16x1xf32> to vector<16x16xf32>
    %44 = arith.mulf %43, %42 : vector<16x16xf32>
    %cst_39 = arith.constant dense<0.000000e+00> : vector<16x16xf32>
    %45 = tpu.matmul %0, %19, %cst_39 {dimension_numbers = #tpu.dot_dimension_numbers<[1], [0], [0], [1], [0, 0, 1, 1], [], []>} : vector<16x4xf32>, vector<4x16xf32>, vector<16x16xf32> -> vector<16x16xf32>
    %46 = arith.addf %44, %45 : vector<16x16xf32>
    %47 = vector.broadcast %20 : vector<1x16xf32> to vector<16x16xf32>
    %48 = arith.addf %46, %47 : vector<16x16xf32>
    %cst_40 = arith.constant 0.000000e+00 : f32
    %49 = vector.broadcast %cst_40 : f32 to vector<16x16xf32>
    %50 = arith.cmpf ogt, %48, %49 : vector<16x16xf32>
    %cst_41 = arith.constant 0.000000e+00 : f32
    %51 = vector.broadcast %cst_41 : f32 to vector<16x16xf32>
    %52 = arith.minimumf %48, %51 : vector<16x16xf32>
    %53 = math.exp %52 : vector<16x16xf32>
    %cst_42 = arith.constant 1.000000e+00 : f32
    %54 = vector.broadcast %cst_42 : f32 to vector<16x16xf32>
    %55 = arith.subf %53, %54 : vector<16x16xf32>
    %56 = arith.select %50, %48, %55 : vector<16x16xi1>, vector<16x16xf32>
    %cst_43 = arith.constant dense<0.000000e+00> : vector<32x16xf32>
    %57 = tpu.matmul %5, %56, %cst_43 {dimension_numbers = #tpu.dot_dimension_numbers<[1], [0], [0], [1], [0, 0, 1, 1], [], []>} : vector<32x16xf32>, vector<16x16xf32>, vector<32x16xf32> -> vector<32x16xf32>
    %cst_44 = arith.constant dense<0.000000e+00> : vector<32x512xf32>
    %58 = tpu.matmul %57, %17, %cst_44 {dimension_numbers = #tpu.dot_dimension_numbers<[1], [0], [0], [1], [0, 0, 1, 1], [], []>} : vector<32x16xf32>, vector<16x512xf32>, vector<32x512xf32> -> vector<32x512xf32>
    %59 = arith.mulf %58, %36 : vector<32x512xf32>
    %cst_45 = arith.constant dense<0.000000e+00> : vector<32x32xf32>
    %60 = tpu.matmul %59, %21, %cst_45 {dimension_numbers = #tpu.dot_dimension_numbers<[1], [0], [0], [1], [0, 0, 1, 1], [], []>} : vector<32x512xf32>, vector<512x32xf32>, vector<32x32xf32> -> vector<32x32xf32>
    %cst_46 = arith.constant dense<0.000000e+00> : vector<16x32xf32>
    %61 = tpu.matmul %9, %60, %cst_46 {dimension_numbers = #tpu.dot_dimension_numbers<[1], [0], [0], [1], [0, 0, 1, 1], [], []>} : vector<16x32xf32>, vector<32x32xf32>, vector<16x32xf32> -> vector<16x32xf32>
    %62 = vector.broadcast %2 : vector<16x1xf32> to vector<16x32xf32>
    %63 = arith.mulf %62, %61 : vector<16x32xf32>
    %cst_47 = arith.constant dense<0.000000e+00> : vector<16x32xf32>
    %64 = tpu.matmul %56, %22, %cst_47 {dimension_numbers = #tpu.dot_dimension_numbers<[1], [0], [0], [1], [0, 0, 1, 1], [], []>} : vector<16x16xf32>, vector<16x32xf32>, vector<16x32xf32> -> vector<16x32xf32>
    %65 = arith.addf %63, %64 : vector<16x32xf32>
    %66 = vector.broadcast %23 : vector<1x32xf32> to vector<16x32xf32>
    %67 = arith.addf %65, %66 : vector<16x32xf32>
    %cst_48 = arith.constant 0.000000e+00 : f32
    %68 = vector.broadcast %cst_48 : f32 to vector<16x32xf32>
    %69 = arith.cmpf ogt, %67, %68 : vector<16x32xf32>
    %cst_49 = arith.constant 0.000000e+00 : f32
    %70 = vector.broadcast %cst_49 : f32 to vector<16x32xf32>
    %71 = arith.minimumf %67, %70 : vector<16x32xf32>
    %72 = math.exp %71 : vector<16x32xf32>
    %cst_50 = arith.constant 1.000000e+00 : f32
    %73 = vector.broadcast %cst_50 : f32 to vector<16x32xf32>
    %74 = arith.subf %72, %73 : vector<16x32xf32>
    %75 = arith.select %69, %67, %74 : vector<16x32xi1>, vector<16x32xf32>
    %cst_51 = arith.constant dense<0.000000e+00> : vector<2x32xf32>
    %76 = tpu.matmul %7, %75, %cst_51 {dimension_numbers = #tpu.dot_dimension_numbers<[1], [0], [0], [1], [0, 0, 1, 1], [], []>} : vector<2x16xf32>, vector<16x32xf32>, vector<2x32xf32> -> vector<2x32xf32>
    %77 = vector.broadcast %3 : vector<2x1xf32> to vector<2x32xf32>
    %78 = arith.mulf %77, %76 : vector<2x32xf32>
    %cst_52 = arith.constant dense<0.000000e+00> : vector<2x64xf32>
    %79 = tpu.matmul %78, %10, %cst_52 {dimension_numbers = #tpu.dot_dimension_numbers<[1], [0], [0], [1], [0, 0, 1, 1], [], []>} : vector<2x32xf32>, vector<32x64xf32>, vector<2x64xf32> -> vector<2x64xf32>
    %80 = vector.broadcast %12 : vector<1x64xf32> to vector<2x64xf32>
    %81 = arith.addf %79, %80 : vector<2x64xf32>
    %cst_53 = arith.constant 0.000000e+00 : f32
    %82 = vector.broadcast %cst_53 : f32 to vector<2x64xf32>
    %83 = arith.cmpf ogt, %81, %82 : vector<2x64xf32>
    %cst_54 = arith.constant 0.000000e+00 : f32
    %84 = vector.broadcast %cst_54 : f32 to vector<2x64xf32>
    %85 = arith.minimumf %81, %84 : vector<2x64xf32>
    %86 = math.exp %85 : vector<2x64xf32>
    %cst_55 = arith.constant 1.000000e+00 : f32
    %87 = vector.broadcast %cst_55 : f32 to vector<2x64xf32>
    %88 = arith.subf %86, %87 : vector<2x64xf32>
    %89 = arith.select %83, %81, %88 : vector<2x64xi1>, vector<2x64xf32>
    %cst_56 = arith.constant dense<0.000000e+00> : vector<2x3xf32>
    %90 = tpu.matmul %89, %24, %cst_56 {dimension_numbers = #tpu.dot_dimension_numbers<[1], [0], [0], [1], [0, 0, 1, 1], [], []>} : vector<2x64xf32>, vector<64x3xf32>, vector<2x3xf32> -> vector<2x3xf32>
    %91 = vector.broadcast %25 : vector<1x3xf32> to vector<2x3xf32>
    %92 = arith.addf %90, %91 : vector<2x3xf32>
    %cst_57 = arith.constant dense<0xFF800000> : vector<2xf32>
    %93 = vector.multi_reduction <maximumf>, %92, %cst_57 [1] : vector<2x3xf32> to vector<2xf32>
    %94 = vector.shape_cast %93 : vector<2xf32> to vector<2x1xf32>
    %95 = vector.broadcast %94 : vector<2x1xf32> to vector<2x3xf32>
    %96 = arith.subf %92, %95 : vector<2x3xf32>
    %97 = math.exp %96 : vector<2x3xf32>
    %cst_58 = arith.constant dense<0.000000e+00> : vector<2xf32>
    %98 = vector.multi_reduction <add>, %97, %cst_58 [1] : vector<2x3xf32> to vector<2xf32>
    %99 = vector.shape_cast %98 : vector<2xf32> to vector<2x1xf32>
    %100 = math.log %99 : vector<2x1xf32>
    %101 = vector.broadcast %94 : vector<2x1xf32> to vector<2x3xf32>
    %102 = arith.subf %92, %101 : vector<2x3xf32>
    %103 = vector.broadcast %100 : vector<2x1xf32> to vector<2x3xf32>
    %104 = arith.subf %102, %103 : vector<2x3xf32>
    %c0_59 = arith.constant 0 : index
    %c0_60 = arith.constant 0 : index
    %105 = vector.load %arg9[%c0_59, %c0_60] : memref<2x3xf32, #tpu.memory_space<vmem>>, vector<2x3xf32>
    tpu.vector_store %arg9[%c0_59, %c0_60], %104 {strides = array<i32>} : memref<2x3xf32, #tpu.memory_space<vmem>>, vector<2x3xf32>,
    return
  }
}

</mosaic_0001>

<llo_original>
// kernel: tpu_custom_call.1
$region0: #{tpu_custom_call.1}
  #allocation0 [shape = 'u32[]', space=smem, size = 0x4, offset = 0x4, fixed_abs, tag = 'smem constant byte address 0x4 - core index']
  #allocation1 [shape = 'u32[144,128]{1,0:T(1,128)}', space=vmem, size = 0x12000, scoped, tag = 'internal scratch']
  %s0 = inlined_call_operand.vmem [shape: f32[16,4], index: 0, kind: input, shape index: {}]
  %s1 = inlined_call_operand.vmem [shape: f32[50,1], index: 1, kind: input, shape index: {}]
  %s2 = inlined_call_operand.vmem [shape: bf16[34,16], index: 2, kind: input, shape index: {}]
  %s3 = inlined_call_operand.vmem [shape: bf16[16,32], index: 3, kind: input, shape index: {}]
  %s4 = inlined_call_operand.vmem [shape: f32[39,64], index: 4, kind: input, shape index: {}]
  %s5 = inlined_call_operand.vmem [shape: f32[40,576], index: 5, kind: input, shape index: {}]
  %s6 = inlined_call_operand.vmem [shape: f32[69,16], index: 6, kind: input, shape index: {}]
  %s7 = inlined_call_operand.vmem [shape: f32[529,32], index: 7, kind: input, shape index: {}]
  %s8 = inlined_call_operand.vmem [shape: f32[65,3], index: 8, kind: input, shape index: {}]
  %s9 = inlined_call_operand.hbm [shape: f32[2,3], index: 9, kind: output, shape index: {}]
  %s10 = sld [smem:[#allocation0]]
  $region46: #{tpu_custom_call.1} parent=0
    _
  %s12 = ssub.s32 1, %s10
  %s13 = scalar_select 0, %s12, %s10
  $region1: #{tpu_custom_call.1} parent=0
    #allocation2 [shape = 'u8[1024]{0}', space=vmem, size = 0x400, scoped, tag = 'output window, operand 0, single buffered']
    #allocation3 [shape = 's32[1]{0}', space=sflag, size = 0x4, scoped, tag = 'scoped memory for tpu_custom_call.1']
    %14 = vsyncpa [#allocation3], 0
    // Predicated region
    $region2: #{tpu_custom_call.1} parent=1 // pred_check
      _
    $region3: #{tpu_custom_call.1} parent=1 // pred_check_branch
      %16 = sbr.rel (0) target = $region5
    $region4: #{tpu_custom_call.1} parent=1 // pred_region
      _
    $region5: #{tpu_custom_call.1} parent=1 // pred_fallthru
      _
    // Predicated region
    $region6: #{tpu_custom_call.1} parent=1 // pred_check
      _
    $region7: #{tpu_custom_call.1} parent=1 // pred_check_branch
      %18 = sbr.rel (0) target = $region9
    $region8: #{tpu_custom_call.1} parent=1 // pred_region
      _
    $region9: #{tpu_custom_call.1} parent=1 // pred_fallthru
      _
    // Predicated region
    $region10: #{tpu_custom_call.1} parent=1 // pred_check
      _
    $region11: #{tpu_custom_call.1} parent=1 // pred_check_branch
      %20 = sbr.rel (0) target = $region13
    $region12: #{tpu_custom_call.1} parent=1 // pred_region
      _
    $region13: #{tpu_custom_call.1} parent=1 // pred_fallthru
      _
    // Predicated region
    $region14: #{tpu_custom_call.1} parent=1 // pred_check
      _
    $region15: #{tpu_custom_call.1} parent=1 // pred_check_branch
      %22 = sbr.rel (0) target = $region17
    $region16: #{tpu_custom_call.1} parent=1 // pred_region
      _
    $region17: #{tpu_custom_call.1} parent=1 // pred_fallthru
      _
    // Predicated region
    $region18: #{tpu_custom_call.1} parent=1 // pred_check
      _
    $region19: #{tpu_custom_call.1} parent=1 // pred_check_branch
      %24 = sbr.rel (0) target = $region21
    $region20: #{tpu_custom_call.1} parent=1 // pred_region
      _
    $region21: #{tpu_custom_call.1} parent=1 // pred_fallthru
      _
    // Predicated region
    $region22: #{tpu_custom_call.1} parent=1 // pred_check
      _
    $region23: #{tpu_custom_call.1} parent=1 // pred_check_branch
      %26 = sbr.rel (0) target = $region25
    $region24: #{tpu_custom_call.1} parent=1 // pred_region
      _
    $region25: #{tpu_custom_call.1} parent=1 // pred_fallthru
      _
    // Predicated region
    $region26: #{tpu_custom_call.1} parent=1 // pred_check
      _
    $region27: #{tpu_custom_call.1} parent=1 // pred_check_branch
      %28 = sbr.rel (0) target = $region29
    $region28: #{tpu_custom_call.1} parent=1 // pred_region
      _
    $region29: #{tpu_custom_call.1} parent=1 // pred_fallthru
      _
    // Predicated region
    $region30: #{tpu_custom_call.1} parent=1 // pred_check
      _
    $region31: #{tpu_custom_call.1} parent=1 // pred_check_branch
      %30 = sbr.rel (0) target = $region33
    $region32: #{tpu_custom_call.1} parent=1 // pred_region
      _
    $region33: #{tpu_custom_call.1} parent=1 // pred_fallthru
      _
    // Predicated region
    $region34: #{tpu_custom_call.1} parent=1 // pred_check
      _
    $region35: #{tpu_custom_call.1} parent=1 // pred_check_branch
      %32 = sbr.rel (0) target = $region37
    $region36: #{tpu_custom_call.1} parent=1 // pred_region
      _
    $region37: #{tpu_custom_call.1} parent=1 // pred_fallthru
      _
    %v33 = vld [vmem:[%s0] sm:$0xff]
    %v34 = vld [vmem:[%s0 + $0x8] sm:$0xff]
    %v35 = vld [vmem:[%s1] sm:$0xff]
    %v36 = vld [vmem:[%s1 + $0x8] sm:$0xff]
    %v37 = vld [vmem:[%s1 + $0x10] sm:$0xff]
    %v38 = vld [vmem:[%s1 + $0x18] sm:$0xff]
    %v39 = vld [vmem:[%s1 + $0x20] sm:$0xff]
    %v40 = vld [vmem:[%s1 + $0x28] sm:$0xff]
    %v41 = vld [vmem:[%s1 + $0x30] sm:$0x3]
    %v42 = vld [vmem:[%s2] sm:$0xf]
    %v43 = vld [vmem:[%s2 + $0x4] sm:$0xf]
    %v44 = vld [vmem:[%s2 + $0x8] sm:$0xf]
    %v45 = vld [vmem:[%s2 + $0xc] sm:$0xf]
    %v46 = vunpack.c.l.bf16 %v42
    %v47 = vunpack.c.l.bf16 %v43
    %v48 = vunpack.c.l.bf16 %v44
    %v49 = vunpack.c.l.bf16 %v45
    %v50 = vld [vmem:[%s2 + $0x10] sm:$0x1]
    %v51 = vunpack.c.l.bf16 %v50
    %v52 = vld [vmem:[%s3] sm:$0xf]
    %v53 = vld [vmem:[%s3 + $0x4] sm:$0xf]
    %v54 = vunpack.c.l.bf16 %v52
    %v55 = vunpack.c.l.bf16 %v53
    %v56 = vld [vmem:[%s4] sm:$0xff]
    %v57 = vld [vmem:[%s4 + $0x8] sm:$0xff]
    %v58 = vld [vmem:[%s4 + $0x10] sm:$0xff]
    %v59 = vld [vmem:[%s4 + $0x18] sm:$0xff]
    %v60 = vld [vmem:[%s4 + $0x20] sm:$0xf]
    %v61 = vld [vmem:[%s4 + $0x24] sm:$0x1]
    %v62 = vld [vmem:[%s4 + $0x25] sm:$0x1]
    %v63 = vld [vmem:[%s4 + $0x26] sm:$0x1]
    %v64 = vld [vmem:[%s5] sm:$0xff]
    %v65 = vld [vmem:[%s5 + $0x8] sm:$0xff]
    %v66 = vld [vmem:[%s5 + $0x10] sm:$0xff]
    %v67 = vld [vmem:[%s5 + $0x18] sm:$0xff]
    %v68 = vld [vmem:[%s5 + $0x20] sm:$0xff]
    %v69 = vld [vmem:[%s5 + $0x28] sm:$0xff]
    %v70 = vld [vmem:[%s5 + $0x30] sm:$0xff]
    %v71 = vld [vmem:[%s5 + $0x38] sm:$0xff]
    %v72 = vld [vmem:[%s5 + $0x40] sm:$0xff]
    %v73 = vld [vmem:[%s5 + $0x48] sm:$0xff]
    %v74 = vld [vmem:[%s5 + $0x50] sm:$0xf]
    %v75 = vld [vmem:[%s5 + $0x58] sm:$0xf]
    %v76 = vld [vmem:[%s5 + $0x60] sm:$0xf]
    %v77 = vld [vmem:[%s5 + $0x68] sm:$0xf]
    %v78 = vld [vmem:[%s5 + $0x70] sm:$0xf]
    %s79 = scalar_lea.vmem %s5, 84
    %v80 = vld [vmem:[%s79] ss:$8 sm:$0xf]
    %v81 = vld [vmem:[%s79] ss:$8 sm:$0x10]
    %v82 = vor.u32 %v80, %v81
    %v83 = vld [vmem:[%s5 + $0x78] sm:$0xff]
    %v84 = vld [vmem:[%s5 + $0x80] sm:$0xff]
    %v85 = vld [vmem:[%s5 + $0x88] sm:$0xff]
    %v86 = vld [vmem:[%s5 + $0x90] sm:$0xff]
    %v87 = vld [vmem:[%s5 + $0xa0] sm:$0xff]
    %v88 = vld [vmem:[%s5 + $0xa8] sm:$0xff]
    %v89 = vld [vmem:[%s5 + $0xb0] sm:$0xff]
    %v90 = vld [vmem:[%s5 + $0xb8] sm:$0xff]
    %v91 = vld [vmem:[%s6] sm:$0xff]
    %v92 = vld [vmem:[%s6 + $0x8] sm:$0xff]
    %v93 = vld [vmem:[%s6 + $0x10] sm:$0xff]
    %v94 = vld [vmem:[%s6 + $0x18] sm:$0xff]
    %v95 = vld [vmem:[%s6 + $0x20] sm:$0xff]
    %v96 = vld [vmem:[%s6 + $0x28] sm:$0xff]
    %v97 = vld [vmem:[%s6 + $0x30] sm:$0xff]
    %v98 = vld [vmem:[%s6 + $0x38] sm:$0xff]
    %v99 = vld [vmem:[%s6 + $0x40] sm:$0xf]
    %v100 = vld [vmem:[%s6 + $0x44] sm:$0x1]
    %v101 = vld [vmem:[%s7] sm:$0xff]
    %v102 = vld [vmem:[%s7 + $0x8] sm:$0xff]
    %v103 = vld [vmem:[%s7 + $0x10] sm:$0xff]
    %v104 = vld [vmem:[%s7 + $0x18] sm:$0xff]
    %v105 = vld [vmem:[%s7 + $0x20] sm:$0xff]
    %v106 = vld [vmem:[%s7 + $0x28] sm:$0xff]
    %v107 = vld [vmem:[%s7 + $0x30] sm:$0xff]
    %v108 = vld [vmem:[%s7 + $0x38] sm:$0xff]
    %v109 = vld [vmem:[%s7 + $0x40] sm:$0xff]
    %v110 = vld [vmem:[%s7 + $0x48] sm:$0xff]
    %v111 = vld [vmem:[%s7 + $0x50] sm:$0xff]
    %v112 = vld [vmem:[%s7 + $0x58] sm:$0xff]
    %v113 = vld [vmem:[%s7 + $0x60] sm:$0xff]
    %v114 = vld [vmem:[%s7 + $0x68] sm:$0xff]
    %v115 = vld [vmem:[%s7 + $0x70] sm:$0xff]
    %v116 = vld [vmem:[%s7 + $0x78] sm:$0xff]
    %v117 = vld [vmem:[%s7 + $0x80] sm:$0xff]
    %v118 = vld [vmem:[%s7 + $0x88] sm:$0xff]
    %v119 = vld [vmem:[%s7 + $0x90] sm:$0xff]
    %v120 = vld [vmem:[%s7 + $0x98] sm:$0xff]
    %v121 = vld [vmem:[%s7 + $0xa0] sm:$0xff]
    %v122 = vld [vmem:[%s7 + $0xa8] sm:$0xff]
    %v123 = vld [vmem:[%s7 + $0xb0] sm:$0xff]
    %v124 = vld [vmem:[%s7 + $0xb8] sm:$0xff]
    %v125 = vld [vmem:[%s7 + $0xc0] sm:$0xff]
    %v126 = vld [vmem:[%s7 + $0xc8] sm:$0xff]
    %v127 = vld [vmem:[%s7 + $0xd0] sm:$0xff]
    %v128 = vld [vmem:[%s7 + $0xd8] sm:$0xff]
    %v129 = vld [vmem:[%s7 + $0xe0] sm:$0xff]
    %v130 = vld [vmem:[%s7 + $0xe8] sm:$0xff]
    %v131 = vld [vmem:[%s7 + $0xf0] sm:$0xff]
    %v132 = vld [vmem:[%s7 + $0xf8] sm:$0xff]
    %v133 = vld [vmem:[%s7 + $0x100] sm:$0xff]
    %v134 = vld [vmem:[%s7 + $0x108] sm:$0xff]
    %v135 = vld [vmem:[%s7 + $0x110] sm:$0xff]
    %v136 = vld [vmem:[%s7 + $0x118] sm:$0xff]
    %v137 = vld [vmem:[%s7 + $0x120] sm:$0xff]
    %v138 = vld [vmem:[%s7 + $0x128] sm:$0xff]
    %v139 = vld [vmem:[%s7 + $0x130] sm:$0xff]
    %v140 = vld [vmem:[%s7 + $0x138] sm:$0xff]
    %v141 = vld [vmem:[%s7 + $0x140] sm:$0xff]
    %v142 = vld [vmem:[%s7 + $0x148] sm:$0xff]
    %v143 = vld [vmem:[%s7 + $0x150] sm:$0xff]
    %v144 = vld [vmem:[%s7 + $0x158] sm:$0xff]
    %v145 = vld [vmem:[%s7 + $0x160] sm:$0xff]
    %v146 = vld [vmem:[%s7 + $0x168] sm:$0xff]
    %v147 = vld [vmem:[%s7 + $0x170] sm:$0xff]
    %v148 = vld [vmem:[%s7 + $0x178] sm:$0xff]
    %v149 = vld [vmem:[%s7 + $0x180] sm:$0xff]
    %v150 = vld [vmem:[%s7 + $0x188] sm:$0xff]
    %v151 = vld [vmem:[%s7 + $0x190] sm:$0xff]
    %v152 = vld [vmem:[%s7 + $0x198] sm:$0xff]
    %v153 = vld [vmem:[%s7 + $0x1a0] sm:$0xff]
    %v154 = vld [vmem:[%s7 + $0x1a8] sm:$0xff]
    %v155 = vld [vmem:[%s7 + $0x1b0] sm:$0xff]
    %v156 = vld [vmem:[%s7 + $0x1b8] sm:$0xff]
    %v157 = vld [vmem:[%s7 + $0x1c0] sm:$0xff]
    %v158 = vld [vmem:[%s7 + $0x1c8] sm:$0xff]
    %v159 = vld [vmem:[%s7 + $0x1d0] sm:$0xff]
    %v160 = vld [vmem:[%s7 + $0x1d8] sm:$0xff]
    %v161 = vld [vmem:[%s7 + $0x1e0] sm:$0xff]
    %v162 = vld [vmem:[%s7 + $0x1e8] sm:$0xff]
    %v163 = vld [vmem:[%s7 + $0x1f0] sm:$0xff]
    %v164 = vld [vmem:[%s7 + $0x1f8] sm:$0xff]
    %v165 = vld [vmem:[%s7 + $0x200] sm:$0xff]
    %v166 = vld [vmem:[%s7 + $0x208] sm:$0xff]
    %v167 = vld [vmem:[%s7 + $0x210] sm:$0x1]
    %v168 = vld [vmem:[%s8] sm:$0xff]
    %v169 = vld [vmem:[%s8 + $0x8] sm:$0xff]
    %v170 = vld [vmem:[%s8 + $0x10] sm:$0xff]
    %v171 = vld [vmem:[%s8 + $0x18] sm:$0xff]
    %v172 = vld [vmem:[%s8 + $0x20] sm:$0xff]
    %v173 = vld [vmem:[%s8 + $0x28] sm:$0xff]
    %v174 = vld [vmem:[%s8 + $0x30] sm:$0xff]
    %v175 = vld [vmem:[%s8 + $0x38] sm:$0xff]
    %v176 = vld [vmem:[%s8 + $0x40] sm:$0x1]
    %178 = vset.pattern.permute.xlu0 0
    %179 = vperm.xlu0 %178, %v35
    %v180 = vpop.permute.xlu0 %179
    %183 = vset.pattern.permute.xlu0 0
    %184 = vperm.xlu0 %183, %v36
    %v185 = vpop.permute.xlu0 %184
    %188 = vset.pattern.permute.xlu0 0
    %189 = vperm.xlu0 %188, %v37
    %v190 = vpop.permute.xlu0 %189
    %193 = vset.pattern.permute.xlu0 0
    %194 = vperm.xlu0 %193, %v38
    %v195 = vpop.permute.xlu0 %194
    %v197 = vlaneseq
    %v198 = vshrl.u32 %v197, 7
    %v199 = vsub.s32 0, %v198
    %v200 = vrot.slane %v62, %v199
    %v201 = vmul.f32 %v180, %v200
    %v202 = vmul.f32 %v185, %v200
    %v203 = vmul.f32 %v190, %v200
    %v204 = vmul.f32 %v195, %v200
    %v205 = vlaneseq
    %v206 = vshrl.u32 %v205, 7
    %v207 = vsub.s32 0, %v206
    %v208 = vrot.slane %v63, %v207
    %v209 = vadd.f32 %v201, %v208
    %v210 = vadd.f32 %v202, %v208
    %v211 = vadd.f32 %v203, %v208
    %v212 = vadd.f32 %v204, %v208
    %v213 = vmax.f32 %v209, 0.0
    %v214 = vmax.f32 %v210, 0.0
    %v215 = vmax.f32 %v211, 0.0
    %v216 = vmax.f32 %v212, 0.0
    %v218 = vlaneseq
    %v219 = vshrl.u32 %v218, 7
    %v220 = vsub.s32 0, %v219
    %v221 = vrot.slane %v82, %v220
    %v222 = vlaneseq
    %v223 = vshrl.u32 %v222, 7
    %v224 = vsub.s32 1, %v223
    %v225 = vrot.slane %v82, %v224
    %v226 = vlaneseq
    %v227 = vshrl.u32 %v226, 7
    %v228 = vsub.s32 2, %v227
    %v229 = vrot.slane %v82, %v228
    %v230 = vlaneseq
    %v231 = vshrl.u32 %v230, 7
    %v232 = vsub.s32 3, %v231
    %v233 = vrot.slane %v82, %v232
    %v234 = vlaneseq
    %v235 = vshrl.u32 %v234, 7
    %v236 = vsub.s32 4, %v235
    %v237 = vrot.slane %v82, %v236
    %vm243 = vcmask 162816
    %v245 = vsel %vm243, %v213, 0
    %v248 = vsel %vm243, %v214, 0
    %v251 = vsel %vm243, %v215, 0
    %v254 = vsel %vm243, %v216, 0
    %vm256 = vcmask 1043456
    %v258 = vsel %vm256, %v74, 0
    %v261 = vsel %vm256, %v75, 0
    %v264 = vsel %vm256, %v76, 0
    %v267 = vsel %vm256, %v77, 0
    %v270 = vsel %vm256, %v78, 0
    %272 = vmatprep.subr.mxu0 %v65
    %273 = vmatpush1.msra.mxu0 %v64
    %274 = vmatprep.subr.mxu0 %v70
    %275 = vmatpush1.msra.mxu0 %v69
    %276 = vmatprep.subr.mxu0 %v261
    %277 = vmatpush1.msra.mxu0 %v258
    %278 = vmatprep.subr.mxu0 0.0
    %279 = vmatpush1.msra.mxu0 0.0
    %280 = vmatprep.subr.mxu0 0.0
    %281 = vmatpush1.msra.mxu0 0.0
    %282 = vmatprep.subr.mxu0 0.0
    %283 = vmatpush1.msra.mxu0 0.0
    %284 = vmatprep.subr.mxu0 0.0
    %285 = vmatpush1.msra.mxu0 0.0
    %286 = vmatprep.subr.mxu0 0.0
    %287 = vmatpush1.msra.mxu0 0.0
    %288 = vmatprep.subr.mxu0 0.0
    %289 = vmatpush1.msra.mxu0 0.0
    %290 = vmatprep.subr.mxu0 0.0
    %291 = vmatpush1.msra.mxu0 0.0
    %292 = vmatprep.subr.mxu0 0.0
    %293 = vmatpush1.msra.mxu0 0.0
    %294 = vmatprep.subr.mxu0 0.0
    %295 = vmatpush1.msra.mxu0 0.0
    %296 = vmatprep.subr.mxu0 0.0
    %297 = vmatpush1.msra.mxu0 0.0
    %298 = vmatprep.subr.mxu0 0.0
    %299 = vmatpush1.msra.mxu0 0.0
    %300 = vmatprep.subr.mxu0 0.0
    %301 = vmatpush1.msra.mxu0 0.0
    %302 = vmatprep.subr.mxu0 0.0
    %303 = vmatpush1.msra.mxu0 0.0
    %304 = vmatprep.subr.mxu0 0.0
    %305 = vmatpush1.msra.mxu0 0.0
    %306 = vmatprep.subr.mxu0 0.0
    %307 = vmatpush1.msra.mxu0 0.0
    %308 = vmatprep.subr.mxu0 0.0
    %309 = vmatpush1.msra.mxu0 0.0
    %310 = vmatprep.subr.mxu0 0.0
    %311 = vmatpush1.msra.mxu0 0.0
    %312 = vmatprep.subr.mxu0 0.0
    %313 = vmatpush1.msra.mxu0 0.0
    %314 = vmatprep.subr.mxu0 0.0
    %315 = vmatpush1.msra.mxu0 0.0
    %316 = vmatprep.subr.mxu0 0.0
    %317 = vmatpush1.msra.mxu0 0.0
    %318 = vmatprep.subr.mxu0 0.0
    %319 = vmatpush1.msra.mxu0 0.0
    %320 = vmatprep.subr.mxu0 0.0
    %321 = vmatpush1.msra.mxu0 0.0
    %322 = vmatprep.subr.mxu0 0.0
    %323 = vmatpush1.msra.mxu0 0.0
    %324 = vmatprep.subr.mxu0 0.0
    %325 = vmatpush1.msra.mxu0 0.0
    %326 = vmatprep.subr.mxu0 0.0
    %327 = vmatpush1.msra.mxu0 0.0
    %328 = vmatprep.subr.mxu0 0.0
    %329 = vmatpush1.msra.mxu0 0.0
    %330 = vmatprep.subr.mxu0 0.0
    %331 = vmatpush1.msra.mxu0 0.0
    %332 = vmatprep.subr.mxu0 0.0
    %333 = vmatpush1.msra.mxu0 0.0
    %334 = vmatprep.subr.mxu0 0.0
    %335 = vmatpush1.msra.mxu0 0.0
    %336 = vmatprep.mubr.f32.mxu0 0.0
    %337 = vmatmul.mubr.f32.gmra.mrb[0].mxu0 %v245
    %v338 = vpop.f32.mrb[0].mxu0
    %v339 = vadd.f32 %v221, %v338
    %v340 = vpop.f32.mrb[0].mxu0
    %v341 = vadd.f32 %v225, %v340
    %342 = vmatprep.mubr.f32.mxu0 0.0
    %343 = vmatmul.mubr.f32.gmra.mrb[0].mxu0 %v248
    %v344 = vpop.f32.mrb[0].mxu0
    %v345 = vadd.f32 %v221, %v344
    %v346 = vpop.f32.mrb[0].mxu0
    %v347 = vadd.f32 %v225, %v346
    %348 = vmatprep.mubr.f32.mxu0 0.0
    %349 = vmatmul.mubr.f32.gmra.mrb[0].mxu0 %v251
    %v350 = vpop.f32.mrb[0].mxu0
    %v351 = vadd.f32 %v221, %v350
    %v352 = vpop.f32.mrb[0].mxu0
    %v353 = vadd.f32 %v225, %v352
    %354 = vmatprep.mubr.f32.mxu0 0.0
    %355 = vmatmul.mubr.f32.gmra.mrb[0].mxu0 %v254
    %v356 = vpop.f32.mrb[0].mxu0
    %v357 = vadd.f32 %v221, %v356
    %v358 = vpop.f32.mrb[0].mxu0
    %v359 = vadd.f32 %v225, %v358
    %360 = vdwg.mxu0
    %361 = vmatprep.subr.mxu0 %v67
    %362 = vmatpush1.msra.mxu0 %v66
    %363 = vmatprep.subr.mxu0 %v72
    %364 = vmatpush1.msra.mxu0 %v71
    %365 = vmatprep.subr.mxu0 %v267
    %366 = vmatpush1.msra.mxu0 %v264
    %367 = vmatprep.subr.mxu0 0.0
    %368 = vmatpush1.msra.mxu0 0.0
    %369 = vmatprep.subr.mxu0 0.0
    %370 = vmatpush1.msra.mxu0 0.0
    %371 = vmatprep.subr.mxu0 0.0
    %372 = vmatpush1.msra.mxu0 0.0
    %373 = vmatprep.subr.mxu0 0.0
    %374 = vmatpush1.msra.mxu0 0.0
    %375 = vmatprep.subr.mxu0 0.0
    %376 = vmatpush1.msra.mxu0 0.0
    %377 = vmatprep.subr.mxu0 0.0
    %378 = vmatpush1.msra.mxu0 0.0
    %379 = vmatprep.subr.mxu0 0.0
    %380 = vmatpush1.msra.mxu0 0.0
    %381 = vmatprep.subr.mxu0 0.0
    %382 = vmatpush1.msra.mxu0 0.0
    %383 = vmatprep.subr.mxu0 0.0
    %384 = vmatpush1.msra.mxu0 0.0
    %385 = vmatprep.subr.mxu0 0.0
    %386 = vmatpush1.msra.mxu0 0.0
    %387 = vmatprep.subr.mxu0 0.0
    %388 = vmatpush1.msra.mxu0 0.0
    %389 = vmatprep.subr.mxu0 0.0
    %390 = vmatpush1.msra.mxu0 0.0
    %391 = vmatprep.subr.mxu0 0.0
    %392 = vmatpush1.msra.mxu0 0.0
    %393 = vmatprep.subr.mxu0 0.0
    %394 = vmatpush1.msra.mxu0 0.0
    %395 = vmatprep.subr.mxu0 0.0
    %396 = vmatpush1.msra.mxu0 0.0
    %397 = vmatprep.subr.mxu0 0.0
    %398 = vmatpush1.msra.mxu0 0.0
    %399 = vmatprep.subr.mxu0 0.0
    %400 = vmatpush1.msra.mxu0 0.0
    %401 = vmatprep.subr.mxu0 0.0
    %402 = vmatpush1.msra.mxu0 0.0
    %403 = vmatprep.subr.mxu0 0.0
    %404 = vmatpush1.msra.mxu0 0.0
    %405 = vmatprep.subr.mxu0 0.0
    %406 = vmatpush1.msra.mxu0 0.0
    %407 = vmatprep.subr.mxu0 0.0
    %408 = vmatpush1.msra.mxu0 0.0
    %409 = vmatprep.subr.mxu0 0.0
    %410 = vmatpush1.msra.mxu0 0.0
    %411 = vmatprep.subr.mxu0 0.0
    %412 = vmatpush1.msra.mxu0 0.0
    %413 = vmatprep.subr.mxu0 0.0
    %414 = vmatpush1.msra.mxu0 0.0
    %415 = vmatprep.subr.mxu0 0.0
    %416 = vmatpush1.msra.mxu0 0.0
    %417 = vmatprep.subr.mxu0 0.0
    %418 = vmatpush1.msra.mxu0 0.0
    %419 = vmatprep.subr.mxu0 0.0
    %420 = vmatpush1.msra.mxu0 0.0
    %421 = vmatprep.subr.mxu0 0.0
    %422 = vmatpush1.msra.mxu0 0.0
    %423 = vmatprep.subr.mxu0 0.0
    %424 = vmatpush1.msra.mxu0 0.0
    %425 = vmatprep.mubr.f32.mxu0 0.0
    %426 = vmatmul.mubr.f32.gmra.mrb[0].mxu0 %v245
    %v427 = vpop.f32.mrb[0].mxu0
    %v428 = vadd.f32 %v229, %v427
    %v429 = vpop.f32.mrb[0].mxu0
    %v430 = vadd.f32 %v233, %v429
    %431 = vmatprep.mubr.f32.mxu0 0.0
    %432 = vmatmul.mubr.f32.gmra.mrb[0].mxu0 %v248
    %v433 = vpop.f32.mrb[0].mxu0
    %v434 = vadd.f32 %v229, %v433
    %v435 = vpop.f32.mrb[0].mxu0
    %v436 = vadd.f32 %v233, %v435
    %437 = vmatprep.mubr.f32.mxu0 0.0
    %438 = vmatmul.mubr.f32.gmra.mrb[0].mxu0 %v251
    %v439 = vpop.f32.mrb[0].mxu0
    %v440 = vadd.f32 %v229, %v439
    %v441 = vpop.f32.mrb[0].mxu0
    %v442 = vadd.f32 %v233, %v441
    %443 = vmatprep.mubr.f32.mxu0 0.0
    %444 = vmatmul.mubr.f32.gmra.mrb[0].mxu0 %v254
    %v445 = vpop.f32.mrb[0].mxu0
    %v446 = vadd.f32 %v229, %v445
    %v447 = vpop.f32.mrb[0].mxu0
    %v448 = vadd.f32 %v233, %v447
    %449 = vdwg.mxu0
    %450 = vmatprep.subr.mxu0 0.0
    %451 = vmatpush1.msra.mxu0 %v68
    %452 = vmatprep.subr.mxu0 0.0
    %453 = vmatpush1.msra.mxu0 %v73
    %454 = vmatprep.subr.mxu0 0.0
    %455 = vmatpush1.msra.mxu0 %v270
    %456 = vmatprep.subr.mxu0 0.0
    %457 = vmatpush1.msra.mxu0 0.0
    %458 = vmatprep.subr.mxu0 0.0
    %459 = vmatpush1.msra.mxu0 0.0
    %460 = vmatprep.subr.mxu0 0.0
    %461 = vmatpush1.msra.mxu0 0.0
    %462 = vmatprep.subr.mxu0 0.0
    %463 = vmatpush1.msra.mxu0 0.0
    %464 = vmatprep.subr.mxu0 0.0
    %465 = vmatpush1.msra.mxu0 0.0
    %466 = vmatprep.subr.mxu0 0.0
    %467 = vmatpush1.msra.mxu0 0.0
    %468 = vmatprep.subr.mxu0 0.0
    %469 = vmatpush1.msra.mxu0 0.0
    %470 = vmatprep.subr.mxu0 0.0
    %471 = vmatpush1.msra.mxu0 0.0
    %472 = vmatprep.subr.mxu0 0.0
    %473 = vmatpush1.msra.mxu0 0.0
    %474 = vmatprep.subr.mxu0 0.0
    %475 = vmatpush1.msra.mxu0 0.0
    %476 = vmatprep.subr.mxu0 0.0
    %477 = vmatpush1.msra.mxu0 0.0
    %478 = vmatprep.subr.mxu0 0.0
    %479 = vmatpush1.msra.mxu0 0.0
    %480 = vmatprep.subr.mxu0 0.0
    %481 = vmatpush1.msra.mxu0 0.0
    %482 = vmatprep.subr.mxu0 0.0
    %483 = vmatpush1.msra.mxu0 0.0
    %484 = vmatprep.subr.mxu0 0.0
    %485 = vmatpush1.msra.mxu0 0.0
    %486 = vmatprep.subr.mxu0 0.0
    %487 = vmatpush1.msra.mxu0 0.0
    %488 = vmatprep.subr.mxu0 0.0
    %489 = vmatpush1.msra.mxu0 0.0
    %490 = vmatprep.subr.mxu0 0.0
    %491 = vmatpush1.msra.mxu0 0.0
    %492 = vmatprep.subr.mxu0 0.0
    %493 = vmatpush1.msra.mxu0 0.0
    %494 = vmatprep.subr.mxu0 0.0
    %495 = vmatpush1.msra.mxu0 0.0
    %496 = vmatprep.subr.mxu0 0.0
    %497 = vmatpush1.msra.mxu0 0.0
    %498 = vmatprep.subr.mxu0 0.0
    %499 = vmatpush1.msra.mxu0 0.0
    %500 = vmatprep.subr.mxu0 0.0
    %501 = vmatpush1.msra.mxu0 0.0
    %502 = vmatprep.subr.mxu0 0.0
    %503 = vmatpush1.msra.mxu0 0.0
    %504 = vmatprep.subr.mxu0 0.0
    %505 = vmatpush1.msra.mxu0 0.0
    %506 = vmatprep.subr.mxu0 0.0
    %507 = vmatpush1.msra.mxu0 0.0
    %508 = vmatprep.subr.mxu0 0.0
    %509 = vmatpush1.msra.mxu0 0.0
    %510 = vmatprep.subr.mxu0 0.0
    %511 = vmatpush1.msra.mxu0 0.0
    %512 = vmatprep.subr.mxu0 0.0
    %513 = vmatpush1.msra.mxu0 0.0
    %514 = vmatprep.mubr.f32.mxu0 0.0
    %515 = vmatmul.mubr.f32.gmra.mrb[0].mxu0 %v245
    %v516 = vpop.f32.mrb[0].mxu0
    %v517 = vadd.f32 %v237, %v516
    %v518 = vpop.f32.mrb[0].mxu0
    %519 = vmatprep.mubr.f32.mxu0 0.0
    %520 = vmatmul.mubr.f32.gmra.mrb[0].mxu0 %v248
    %v521 = vpop.f32.mrb[0].mxu0
    %v522 = vadd.f32 %v237, %v521
    %v523 = vpop.f32.mrb[0].mxu0
    %524 = vmatprep.mubr.f32.mxu0 0.0
    %525 = vmatmul.mubr.f32.gmra.mrb[0].mxu0 %v251
    %v526 = vpop.f32.mrb[0].mxu0
    %v527 = vadd.f32 %v237, %v526
    %v528 = vpop.f32.mrb[0].mxu0
    %529 = vmatprep.mubr.f32.mxu0 0.0
    %530 = vmatmul.mubr.f32.gmra.mrb[0].mxu0 %v254
    %v531 = vpop.f32.mrb[0].mxu0
    %v532 = vadd.f32 %v237, %v531
    %v533 = vpop.f32.mrb[0].mxu0
    %534 = vdwg.mxu0
    %vm535 = vcmask 130048
    %v537 = vsel %vm535, %v46, 0
    %v540 = vsel %vm535, %v47, 0
    %v543 = vsel %vm535, %v48, 0
    %v546 = vsel %vm535, %v49, 0
    %548 = vmatprep.subr.mxu0 0.0
    %549 = vmatpush1.msra.mxu0 %v33
    %550 = vmatprep.subr.mxu0 0.0
    %551 = vmatpush1.msra.mxu0 %v34
    %552 = vmatprep.subr.mxu0 0.0
    %553 = vmatpush1.msra.mxu0 0.0
    %554 = vmatprep.subr.mxu0 0.0
    %555 = vmatpush1.msra.mxu0 0.0
    %556 = vmatprep.subr.mxu0 0.0
    %557 = vmatpush1.msra.mxu0 0.0
    %558 = vmatprep.subr.mxu0 0.0
    %559 = vmatpush1.msra.mxu0 0.0
    %560 = vmatprep.subr.mxu0 0.0
    %561 = vmatpush1.msra.mxu0 0.0
    %562 = vmatprep.subr.mxu0 0.0
    %563 = vmatpush1.msra.mxu0 0.0
    %564 = vmatprep.subr.mxu0 0.0
    %565 = vmatpush1.msra.mxu0 0.0
    %566 = vmatprep.subr.mxu0 0.0
    %567 = vmatpush1.msra.mxu0 0.0
    %568 = vmatprep.subr.mxu0 0.0
    %569 = vmatpush1.msra.mxu0 0.0
    %570 = vmatprep.subr.mxu0 0.0
    %571 = vmatpush1.msra.mxu0 0.0
    %572 = vmatprep.subr.mxu0 0.0
    %573 = vmatpush1.msra.mxu0 0.0
    %574 = vmatprep.subr.mxu0 0.0
    %575 = vmatpush1.msra.mxu0 0.0
    %576 = vmatprep.subr.mxu0 0.0
    %577 = vmatpush1.msra.mxu0 0.0
    %578 = vmatprep.subr.mxu0 0.0
    %579 = vmatpush1.msra.mxu0 0.0
    %580 = vmatprep.subr.mxu0 0.0
    %581 = vmatpush1.msra.mxu0 0.0
    %582 = vmatprep.subr.mxu0 0.0
    %583 = vmatpush1.msra.mxu0 0.0
    %584 = vmatprep.subr.mxu0 0.0
    %585 = vmatpush1.msra.mxu0 0.0
    %586 = vmatprep.subr.mxu0 0.0
    %587 = vmatpush1.msra.mxu0 0.0
    %588 = vmatprep.subr.mxu0 0.0
    %589 = vmatpush1.msra.mxu0 0.0
    %590 = vmatprep.subr.mxu0 0.0
    %591 = vmatpush1.msra.mxu0 0.0
    %592 = vmatprep.subr.mxu0 0.0
    %593 = vmatpush1.msra.mxu0 0.0
    %594 = vmatprep.subr.mxu0 0.0
    %595 = vmatpush1.msra.mxu0 0.0
    %596 = vmatprep.subr.mxu0 0.0
    %597 = vmatpush1.msra.mxu0 0.0
    %598 = vmatprep.subr.mxu0 0.0
    %599 = vmatpush1.msra.mxu0 0.0
    %600 = vmatprep.subr.mxu0 0.0
    %601 = vmatpush1.msra.mxu0 0.0
    %602 = vmatprep.subr.mxu0 0.0
    %603 = vmatpush1.msra.mxu0 0.0
    %604 = vmatprep.subr.mxu0 0.0
    %605 = vmatpush1.msra.mxu0 0.0
    %606 = vmatprep.subr.mxu0 0.0
    %607 = vmatpush1.msra.mxu0 0.0
    %608 = vmatprep.subr.mxu0 0.0
    %609 = vmatpush1.msra.mxu0 0.0
    %610 = vmatprep.subr.mxu0 0.0
    %611 = vmatpush1.msra.mxu0 0.0
    %612 = vmatprep.mubr.f32.mxu0 0.0
    %613 = vmatmul.mubr.f32.gmra.mrb[0].mxu0 %v537
    %v614 = vpop.f32.mrb[0].mxu0
    %v615 = vadd.f32 0.0, %v614
    %v616 = vpop.f32.mrb[0].mxu0
    %617 = vmatprep.mubr.f32.mxu0 0.0
    %618 = vmatmul.mubr.f32.gmra.mrb[0].mxu0 %v540
    %v619 = vpop.f32.mrb[0].mxu0
    %v620 = vadd.f32 0.0, %v619
    %v621 = vpop.f32.mrb[0].mxu0
    %622 = vmatprep.mubr.f32.mxu0 0.0
    %623 = vmatmul.mubr.f32.gmra.mrb[0].mxu0 %v543
    %v624 = vpop.f32.mrb[0].mxu0
    %v625 = vadd.f32 0.0, %v624
    %v626 = vpop.f32.mrb[0].mxu0
    %627 = vmatprep.mubr.f32.mxu0 0.0
    %628 = vmatmul.mubr.f32.gmra.mrb[0].mxu0 %v546
    %v629 = vpop.f32.mrb[0].mxu0
    %v630 = vadd.f32 0.0, %v629
    %v631 = vpop.f32.mrb[0].mxu0
    %632 = vdwg.mxu0
    %vm633 = vcmask 31744
    %v635 = vsel %vm633, %v615, 0
    %v638 = vsel %vm633, %v620, 0
    %v641 = vsel %vm633, %v625, 0
    %v644 = vsel %vm633, %v630, 0
    %v647 = vsel %vm256, %v60, 0
    %649 = vmatprep.subr.mxu0 0.0
    %650 = vmatpush1.msra.mxu0 %v647
    %651 = vmatprep.subr.mxu0 0.0
    %652 = vmatpush1.msra.mxu0 0.0
    %653 = vmatprep.subr.mxu0 0.0
    %654 = vmatpush1.msra.mxu0 0.0
    %655 = vmatprep.subr.mxu0 0.0
    %656 = vmatpush1.msra.mxu0 0.0
    %657 = vmatprep.subr.mxu0 0.0
    %658 = vmatpush1.msra.mxu0 0.0
    %659 = vmatprep.subr.mxu0 0.0
    %660 = vmatpush1.msra.mxu0 0.0
    %661 = vmatprep.subr.mxu0 0.0
    %662 = vmatpush1.msra.mxu0 0.0
    %663 = vmatprep.subr.mxu0 0.0
    %664 = vmatpush1.msra.mxu0 0.0
    %665 = vmatprep.subr.mxu0 0.0
    %666 = vmatpush1.msra.mxu0 0.0
    %667 = vmatprep.subr.mxu0 0.0
    %668 = vmatpush1.msra.mxu0 0.0
    %669 = vmatprep.subr.mxu0 0.0
    %670 = vmatpush1.msra.mxu0 0.0
    %671 = vmatprep.subr.mxu0 0.0
    %672 = vmatpush1.msra.mxu0 0.0
    %673 = vmatprep.subr.mxu0 0.0
    %674 = vmatpush1.msra.mxu0 0.0
    %675 = vmatprep.subr.mxu0 0.0
    %676 = vmatpush1.msra.mxu0 0.0
    %677 = vmatprep.subr.mxu0 0.0
    %678 = vmatpush1.msra.mxu0 0.0
    %679 = vmatprep.subr.mxu0 0.0
    %680 = vmatpush1.msra.mxu0 0.0
    %681 = vmatprep.subr.mxu0 0.0
    %682 = vmatpush1.msra.mxu0 0.0
    %683 = vmatprep.subr.mxu0 0.0
    %684 = vmatpush1.msra.mxu0 0.0
    %685 = vmatprep.subr.mxu0 0.0
    %686 = vmatpush1.msra.mxu0 0.0
    %687 = vmatprep.subr.mxu0 0.0
    %688 = vmatpush1.msra.mxu0 0.0
    %689 = vmatprep.subr.mxu0 0.0
    %690 = vmatpush1.msra.mxu0 0.0
    %691 = vmatprep.subr.mxu0 0.0
    %692 = vmatpush1.msra.mxu0 0.0
    %693 = vmatprep.subr.mxu0 0.0
    %694 = vmatpush1.msra.mxu0 0.0
    %695 = vmatprep.subr.mxu0 0.0
    %696 = vmatpush1.msra.mxu0 0.0
    %697 = vmatprep.subr.mxu0 0.0
    %698 = vmatpush1.msra.mxu0 0.0
    %699 = vmatprep.subr.mxu0 0.0
    %700 = vmatpush1.msra.mxu0 0.0
    %701 = vmatprep.subr.mxu0 0.0
    %702 = vmatpush1.msra.mxu0 0.0
    %703 = vmatprep.subr.mxu0 0.0
    %704 = vmatpush1.msra.mxu0 0.0
    %705 = vmatprep.subr.mxu0 0.0
    %706 = vmatpush1.msra.mxu0 0.0
    %707 = vmatprep.subr.mxu0 0.0
    %708 = vmatpush1.msra.mxu0 0.0
    %709 = vmatprep.subr.mxu0 0.0
    %710 = vmatpush1.msra.mxu0 0.0
    %711 = vmatprep.subr.mxu0 0.0
    %712 = vmatpush1.msra.mxu0 0.0
    %713 = vmatprep.mubr.f32.mxu0 0.0
    %714 = vmatmul.mubr.f32.gmra.mrb[0].mxu0 %v635
    %v715 = vpop.f32.mrb[0].mxu0
    %v716 = vadd.f32 0.0, %v715
    %v717 = vpop.f32.mrb[0].mxu0
    %718 = vmatprep.mubr.f32.mxu0 0.0
    %719 = vmatmul.mubr.f32.gmra.mrb[0].mxu0 %v638
    %v720 = vpop.f32.mrb[0].mxu0
    %v721 = vadd.f32 0.0, %v720
    %v722 = vpop.f32.mrb[0].mxu0
    %723 = vmatprep.mubr.f32.mxu0 0.0
    %724 = vmatmul.mubr.f32.gmra.mrb[0].mxu0 %v641
    %v725 = vpop.f32.mrb[0].mxu0
    %v726 = vadd.f32 0.0, %v725
    %v727 = vpop.f32.mrb[0].mxu0
    %728 = vmatprep.mubr.f32.mxu0 0.0
    %729 = vmatmul.mubr.f32.gmra.mrb[0].mxu0 %v644
    %v730 = vpop.f32.mrb[0].mxu0
    %v731 = vadd.f32 0.0, %v730
    %v732 = vpop.f32.mrb[0].mxu0
    %733 = vdwg.mxu0
    %v734 = vmul.f32 %v716, %v517
    %v735 = vmul.f32 %v721, %v522
    %v736 = vmul.f32 %v726, %v527
    %v737 = vmul.f32 %v731, %v532
    %vm738 = vcmask 523264
    %v740 = vsel %vm738, %v734, 0
    %v743 = vsel %vm738, %v735, 0
    %v746 = vsel %vm738, %v736, 0
    %v749 = vsel %vm738, %v737, 0
    %751 = vmatprep.subr.mxu0 0.0
    %752 = vmatpush1.msra.mxu0 %v91
    %753 = vmatprep.subr.mxu0 0.0
    %754 = vmatpush1.msra.mxu0 %v92
    %755 = vmatprep.subr.mxu0 0.0
    %756 = vmatpush1.msra.mxu0 %v93
    %757 = vmatprep.subr.mxu0 0.0
    %758 = vmatpush1.msra.mxu0 %v94
    %759 = vmatprep.subr.mxu0 0.0
    %760 = vmatpush1.msra.mxu0 %v95
    %761 = vmatprep.subr.mxu0 0.0
    %762 = vmatpush1.msra.mxu0 %v96
    %763 = vmatprep.subr.mxu0 0.0
    %764 = vmatpush1.msra.mxu0 %v97
    %765 = vmatprep.subr.mxu0 0.0
    %766 = vmatpush1.msra.mxu0 %v98
    %767 = vmatprep.subr.mxu0 0.0
    %768 = vmatpush1.msra.mxu0 0.0
    %769 = vmatprep.subr.mxu0 0.0
    %770 = vmatpush1.msra.mxu0 0.0
    %771 = vmatprep.subr.mxu0 0.0
    %772 = vmatpush1.msra.mxu0 0.0
    %773 = vmatprep.subr.mxu0 0.0
    %774 = vmatpush1.msra.mxu0 0.0
    %775 = vmatprep.subr.mxu0 0.0
    %776 = vmatpush1.msra.mxu0 0.0
    %777 = vmatprep.subr.mxu0 0.0
    %778 = vmatpush1.msra.mxu0 0.0
    %779 = vmatprep.subr.mxu0 0.0
    %780 = vmatpush1.msra.mxu0 0.0
    %781 = vmatprep.subr.mxu0 0.0
    %782 = vmatpush1.msra.mxu0 0.0
    %783 = vmatprep.subr.mxu0 0.0
    %784 = vmatpush1.msra.mxu0 0.0
    %785 = vmatprep.subr.mxu0 0.0
    %786 = vmatpush1.msra.mxu0 0.0
    %787 = vmatprep.subr.mxu0 0.0
    %788 = vmatpush1.msra.mxu0 0.0
    %789 = vmatprep.subr.mxu0 0.0
    %790 = vmatpush1.msra.mxu0 0.0
    %791 = vmatprep.subr.mxu0 0.0
    %792 = vmatpush1.msra.mxu0 0.0
    %793 = vmatprep.subr.mxu0 0.0
    %794 = vmatpush1.msra.mxu0 0.0
    %795 = vmatprep.subr.mxu0 0.0
    %796 = vmatpush1.msra.mxu0 0.0
    %797 = vmatprep.subr.mxu0 0.0
    %798 = vmatpush1.msra.mxu0 0.0
    %799 = vmatprep.subr.mxu0 0.0
    %800 = vmatpush1.msra.mxu0 0.0
    %801 = vmatprep.subr.mxu0 0.0
    %802 = vmatpush1.msra.mxu0 0.0
    %803 = vmatprep.subr.mxu0 0.0
    %804 = vmatpush1.msra.mxu0 0.0
    %805 = vmatprep.subr.mxu0 0.0
    %806 = vmatpush1.msra.mxu0 0.0
    %807 = vmatprep.subr.mxu0 0.0
    %808 = vmatpush1.msra.mxu0 0.0
    %809 = vmatprep.subr.mxu0 0.0
    %810 = vmatpush1.msra.mxu0 0.0
    %811 = vmatprep.subr.mxu0 0.0
    %812 = vmatpush1.msra.mxu0 0.0
    %813 = vmatprep.subr.mxu0 0.0
    %814 = vmatpush1.msra.mxu0 0.0
    %815 = vmatprep.mubr.f32.mxu0 0.0
    %816 = vmatmul.mubr.f32.gmra.mrb[0].mxu0 %v740
    %v817 = vpop.f32.mrb[0].mxu0
    %v818 = vadd.f32 0.0, %v817
    %v819 = vpop.f32.mrb[0].mxu0
    %820 = vmatprep.mubr.f32.mxu0 0.0
    %821 = vmatmul.mubr.f32.gmra.mrb[0].mxu0 %v743
    %v822 = vpop.f32.mrb[0].mxu0
    %v823 = vadd.f32 0.0, %v822
    %v824 = vpop.f32.mrb[0].mxu0
    %825 = vmatprep.mubr.f32.mxu0 0.0
    %826 = vmatmul.mubr.f32.gmra.mrb[0].mxu0 %v746
    %v827 = vpop.f32.mrb[0].mxu0
    %v828 = vadd.f32 0.0, %v827
    %v829 = vpop.f32.mrb[0].mxu0
    %830 = vmatprep.mubr.f32.mxu0 0.0
    %831 = vmatmul.mubr.f32.gmra.mrb[0].mxu0 %v749
    %v832 = vpop.f32.mrb[0].mxu0
    %v833 = vadd.f32 0.0, %v832
    %v834 = vpop.f32.mrb[0].mxu0
    %835 = vdwg.mxu0
    %vm836 = vcmask 261120
    %v838 = vsel %vm836, %v54, 0
    %v841 = vsel %vm836, %v55, 0
    %843 = vmatprep.subr.mxu0 0.0
    %844 = vmatpush1.msra.mxu0 %v818
    %845 = vmatprep.subr.mxu0 0.0
    %846 = vmatpush1.msra.mxu0 %v823
    %847 = vmatprep.subr.mxu0 0.0
    %848 = vmatpush1.msra.mxu0 %v828
    %849 = vmatprep.subr.mxu0 0.0
    %850 = vmatpush1.msra.mxu0 %v833
    %851 = vmatprep.subr.mxu0 0.0
    %852 = vmatpush1.msra.mxu0 0.0
    %853 = vmatprep.subr.mxu0 0.0
    %854 = vmatpush1.msra.mxu0 0.0
    %855 = vmatprep.subr.mxu0 0.0
    %856 = vmatpush1.msra.mxu0 0.0
    %857 = vmatprep.subr.mxu0 0.0
    %858 = vmatpush1.msra.mxu0 0.0
    %859 = vmatprep.subr.mxu0 0.0
    %860 = vmatpush1.msra.mxu0 0.0
    %861 = vmatprep.subr.mxu0 0.0
    %862 = vmatpush1.msra.mxu0 0.0
    %863 = vmatprep.subr.mxu0 0.0
    %864 = vmatpush1.msra.mxu0 0.0
    %865 = vmatprep.subr.mxu0 0.0
    %866 = vmatpush1.msra.mxu0 0.0
    %867 = vmatprep.subr.mxu0 0.0
    %868 = vmatpush1.msra.mxu0 0.0
    %869 = vmatprep.subr.mxu0 0.0
    %870 = vmatpush1.msra.mxu0 0.0
    %871 = vmatprep.subr.mxu0 0.0
    %872 = vmatpush1.msra.mxu0 0.0
    %873 = vmatprep.subr.mxu0 0.0
    %874 = vmatpush1.msra.mxu0 0.0
    %875 = vmatprep.subr.mxu0 0.0
    %876 = vmatpush1.msra.mxu0 0.0
    %877 = vmatprep.subr.mxu0 0.0
    %878 = vmatpush1.msra.mxu0 0.0
    %879 = vmatprep.subr.mxu0 0.0
    %880 = vmatpush1.msra.mxu0 0.0
    %881 = vmatprep.subr.mxu0 0.0
    %882 = vmatpush1.msra.mxu0 0.0
    %883 = vmatprep.subr.mxu0 0.0
    %884 = vmatpush1.msra.mxu0 0.0
    %885 = vmatprep.subr.mxu0 0.0
    %886 = vmatpush1.msra.mxu0 0.0
    %887 = vmatprep.subr.mxu0 0.0
    %888 = vmatpush1.msra.mxu0 0.0
    %889 = vmatprep.subr.mxu0 0.0
    %890 = vmatpush1.msra.mxu0 0.0
    %891 = vmatprep.subr.mxu0 0.0
    %892 = vmatpush1.msra.mxu0 0.0
    %893 = vmatprep.subr.mxu0 0.0
    %894 = vmatpush1.msra.mxu0 0.0
    %895 = vmatprep.subr.mxu0 0.0
    %896 = vmatpush1.msra.mxu0 0.0
    %897 = vmatprep.subr.mxu0 0.0
    %898 = vmatpush1.msra.mxu0 0.0
    %899 = vmatprep.subr.mxu0 0.0
    %900 = vmatpush1.msra.mxu0 0.0
    %901 = vmatprep.subr.mxu0 0.0
    %902 = vmatpush1.msra.mxu0 0.0
    %903 = vmatprep.subr.mxu0 0.0
    %904 = vmatpush1.msra.mxu0 0.0
    %905 = vmatprep.subr.mxu0 0.0
    %906 = vmatpush1.msra.mxu0 0.0
    %907 = vmatprep.mubr.f32.mxu0 0.0
    %908 = vmatmul.mubr.f32.gmra.mrb[0].mxu0 %v838
    %v909 = vpop.f32.mrb[0].mxu0
    %v910 = vadd.f32 0.0, %v909
    %v911 = vpop.f32.mrb[0].mxu0
    %912 = vmatprep.mubr.f32.mxu0 0.0
    %913 = vmatmul.mubr.f32.gmra.mrb[0].mxu0 %v841
    %v914 = vpop.f32.mrb[0].mxu0
    %v915 = vadd.f32 0.0, %v914
    %v916 = vpop.f32.mrb[0].mxu0
    %917 = vdwg.mxu0
    %919 = vset.pattern.permute.xlu0 0
    %920 = vperm.xlu0 %919, %v39
    %v921 = vpop.permute.xlu0 %920
    %924 = vset.pattern.permute.xlu0 0
    %925 = vperm.xlu0 %924, %v40
    %v926 = vpop.permute.xlu0 %925
    %v928 = vmul.f32 %v921, %v910
    %v929 = vmul.f32 %v926, %v915
    %v931 = vsel %vm633, %v33, 0
    %v934 = vsel %vm633, %v34, 0
    %v937 = vsel %vm256, %v99, 0
    %939 = vmatprep.subr.mxu0 0.0
    %940 = vmatpush1.msra.mxu0 %v937
    %941 = vmatprep.subr.mxu0 0.0
    %942 = vmatpush1.msra.mxu0 0.0
    %943 = vmatprep.subr.mxu0 0.0
    %944 = vmatpush1.msra.mxu0 0.0
    %945 = vmatprep.subr.mxu0 0.0
    %946 = vmatpush1.msra.mxu0 0.0
    %947 = vmatprep.subr.mxu0 0.0
    %948 = vmatpush1.msra.mxu0 0.0
    %949 = vmatprep.subr.mxu0 0.0
    %950 = vmatpush1.msra.mxu0 0.0
    %951 = vmatprep.subr.mxu0 0.0
    %952 = vmatpush1.msra.mxu0 0.0
    %953 = vmatprep.subr.mxu0 0.0
    %954 = vmatpush1.msra.mxu0 0.0
    %955 = vmatprep.subr.mxu0 0.0
    %956 = vmatpush1.msra.mxu0 0.0
    %957 = vmatprep.subr.mxu0 0.0
    %958 = vmatpush1.msra.mxu0 0.0
    %959 = vmatprep.subr.mxu0 0.0
    %960 = vmatpush1.msra.mxu0 0.0
    %961 = vmatprep.subr.mxu0 0.0
    %962 = vmatpush1.msra.mxu0 0.0
    %963 = vmatprep.subr.mxu0 0.0
    %964 = vmatpush1.msra.mxu0 0.0
    %965 = vmatprep.subr.mxu0 0.0
    %966 = vmatpush1.msra.mxu0 0.0
    %967 = vmatprep.subr.mxu0 0.0
    %968 = vmatpush1.msra.mxu0 0.0
    %969 = vmatprep.subr.mxu0 0.0
    %970 = vmatpush1.msra.mxu0 0.0
    %971 = vmatprep.subr.mxu0 0.0
    %972 = vmatpush1.msra.mxu0 0.0
    %973 = vmatprep.subr.mxu0 0.0
    %974 = vmatpush1.msra.mxu0 0.0
    %975 = vmatprep.subr.mxu0 0.0
    %976 = vmatpush1.msra.mxu0 0.0
    %977 = vmatprep.subr.mxu0 0.0
    %978 = vmatpush1.msra.mxu0 0.0
    %979 = vmatprep.subr.mxu0 0.0
    %980 = vmatpush1.msra.mxu0 0.0
    %981 = vmatprep.subr.mxu0 0.0
    %982 = vmatpush1.msra.mxu0 0.0
    %983 = vmatprep.subr.mxu0 0.0
    %984 = vmatpush1.msra.mxu0 0.0
    %985 = vmatprep.subr.mxu0 0.0
    %986 = vmatpush1.msra.mxu0 0.0
    %987 = vmatprep.subr.mxu0 0.0
    %988 = vmatpush1.msra.mxu0 0.0
    %989 = vmatprep.subr.mxu0 0.0
    %990 = vmatpush1.msra.mxu0 0.0
    %991 = vmatprep.subr.mxu0 0.0
    %992 = vmatpush1.msra.mxu0 0.0
    %993 = vmatprep.subr.mxu0 0.0
    %994 = vmatpush1.msra.mxu0 0.0
    %995 = vmatprep.subr.mxu0 0.0
    %996 = vmatpush1.msra.mxu0 0.0
    %997 = vmatprep.subr.mxu0 0.0
    %998 = vmatpush1.msra.mxu0 0.0
    %999 = vmatprep.subr.mxu0 0.0
    %1000 = vmatpush1.msra.mxu0 0.0
    %1001 = vmatprep.subr.mxu0 0.0
    %1002 = vmatpush1.msra.mxu0 0.0
    %1003 = vmatprep.mubr.f32.mxu0 0.0
    %1004 = vmatmul.mubr.f32.gmra.mrb[0].mxu0 %v931
    %v1005 = vpop.f32.mrb[0].mxu0
    %v1006 = vadd.f32 0.0, %v1005
    %v1007 = vpop.f32.mrb[0].mxu0
    %1008 = vmatprep.mubr.f32.mxu0 0.0
    %1009 = vmatmul.mubr.f32.gmra.mrb[0].mxu0 %v934
    %v1010 = vpop.f32.mrb[0].mxu0
    %v1011 = vadd.f32 0.0, %v1010
    %v1012 = vpop.f32.mrb[0].mxu0
    %1013 = vdwg.mxu0
    %v1014 = vadd.f32 %v928, %v1006
    %v1015 = vadd.f32 %v929, %v1011
    %v1016 = vlaneseq
    %v1017 = vshrl.u32 %v1016, 7
    %v1018 = vsub.s32 0, %v1017
    %v1019 = vrot.slane %v100, %v1018
    %v1020 = vadd.f32 %v1014, %v1019
    %v1021 = vadd.f32 %v1015, %v1019
    %vm1022 = vcmp.gt.f32.partialorder %v1020, 0.0
    %vm1023 = vcmp.gt.f32.partialorder %v1021, 0.0
    %v1024 = vmin.f32 %v1020, 0.0
    %v1025 = vmin.f32 %v1021, 0.0
    %v1026 = vmul.f32 %v1024, 1.442695
    %v1027 = vpow.pop %v1026
    %v1028 = vmul.f32 %v1025, 1.442695
    %v1029 = vpow.pop %v1028
    %v1030 = vsub.f32 %v1027, 1.0
    %v1031 = vsub.f32 %v1029, 1.0
    %v1032 = vsel %vm1022, %v1020, %v1030
    %v1033 = vsel %vm1023, %v1021, %v1031
    %1034 = vmatprep.subr.mxu0 0.0
    %1035 = vmatpush1.msra.mxu0 %v1032
    %1036 = vmatprep.subr.mxu0 0.0
    %1037 = vmatpush1.msra.mxu0 %v1033
    %1038 = vmatprep.subr.mxu0 0.0
    %1039 = vmatpush1.msra.mxu0 0.0
    %1040 = vmatprep.subr.mxu0 0.0
    %1041 = vmatpush1.msra.mxu0 0.0
    %1042 = vmatprep.subr.mxu0 0.0
    %1043 = vmatpush1.msra.mxu0 0.0
    %1044 = vmatprep.subr.mxu0 0.0
    %1045 = vmatpush1.msra.mxu0 0.0
    %1046 = vmatprep.subr.mxu0 0.0
    %1047 = vmatpush1.msra.mxu0 0.0
    %1048 = vmatprep.subr.mxu0 0.0
    %1049 = vmatpush1.msra.mxu0 0.0
    %1050 = vmatprep.subr.mxu0 0.0
    %1051 = vmatpush1.msra.mxu0 0.0
    %1052 = vmatprep.subr.mxu0 0.0
    %1053 = vmatpush1.msra.mxu0 0.0
    %1054 = vmatprep.subr.mxu0 0.0
    %1055 = vmatpush1.msra.mxu0 0.0
    %1056 = vmatprep.subr.mxu0 0.0
    %1057 = vmatpush1.msra.mxu0 0.0
    %1058 = vmatprep.subr.mxu0 0.0
    %1059 = vmatpush1.msra.mxu0 0.0
    %1060 = vmatprep.subr.mxu0 0.0
    %1061 = vmatpush1.msra.mxu0 0.0
    %1062 = vmatprep.subr.mxu0 0.0
    %1063 = vmatpush1.msra.mxu0 0.0
    %1064 = vmatprep.subr.mxu0 0.0
    %1065 = vmatpush1.msra.mxu0 0.0
    %1066 = vmatprep.subr.mxu0 0.0
    %1067 = vmatpush1.msra.mxu0 0.0
    %1068 = vmatprep.subr.mxu0 0.0
    %1069 = vmatpush1.msra.mxu0 0.0
    %1070 = vmatprep.subr.mxu0 0.0
    %1071 = vmatpush1.msra.mxu0 0.0
    %1072 = vmatprep.subr.mxu0 0.0
    %1073 = vmatpush1.msra.mxu0 0.0
    %1074 = vmatprep.subr.mxu0 0.0
    %1075 = vmatpush1.msra.mxu0 0.0
    %1076 = vmatprep.subr.mxu0 0.0
    %1077 = vmatpush1.msra.mxu0 0.0
    %1078 = vmatprep.subr.mxu0 0.0
    %1079 = vmatpush1.msra.mxu0 0.0
    %1080 = vmatprep.subr.mxu0 0.0
    %1081 = vmatpush1.msra.mxu0 0.0
    %1082 = vmatprep.subr.mxu0 0.0
    %1083 = vmatpush1.msra.mxu0 0.0
    %1084 = vmatprep.subr.mxu0 0.0
    %1085 = vmatpush1.msra.mxu0 0.0
    %1086 = vmatprep.subr.mxu0 0.0
    %1087 = vmatpush1.msra.mxu0 0.0
    %1088 = vmatprep.subr.mxu0 0.0
    %1089 = vmatpush1.msra.mxu0 0.0
    %1090 = vmatprep.subr.mxu0 0.0
    %1091 = vmatpush1.msra.mxu0 0.0
    %1092 = vmatprep.subr.mxu0 0.0
    %1093 = vmatpush1.msra.mxu0 0.0
    %1094 = vmatprep.subr.mxu0 0.0
    %1095 = vmatpush1.msra.mxu0 0.0
    %1096 = vmatprep.subr.mxu0 0.0
    %1097 = vmatpush1.msra.mxu0 0.0
    %1098 = vmatprep.mubr.f32.mxu0 0.0
    %1099 = vmatmul.mubr.f32.gmra.mrb[0].mxu0 %v537
    %v1100 = vpop.f32.mrb[0].mxu0
    %v1101 = vadd.f32 0.0, %v1100
    %v1102 = vpop.f32.mrb[0].mxu0
    %1103 = vmatprep.mubr.f32.mxu0 0.0
    %1104 = vmatmul.mubr.f32.gmra.mrb[0].mxu0 %v540
    %v1105 = vpop.f32.mrb[0].mxu0
    %v1106 = vadd.f32 0.0, %v1105
    %v1107 = vpop.f32.mrb[0].mxu0
    %1108 = vmatprep.mubr.f32.mxu0 0.0
    %1109 = vmatmul.mubr.f32.gmra.mrb[0].mxu0 %v543
    %v1110 = vpop.f32.mrb[0].mxu0
    %v1111 = vadd.f32 0.0, %v1110
    %v1112 = vpop.f32.mrb[0].mxu0
    %1113 = vmatprep.mubr.f32.mxu0 0.0
    %1114 = vmatmul.mubr.f32.gmra.mrb[0].mxu0 %v546
    %v1115 = vpop.f32.mrb[0].mxu0
    %v1116 = vadd.f32 0.0, %v1115
    %v1117 = vpop.f32.mrb[0].mxu0
    %1118 = vdwg.mxu0
    %v1120 = vsel %vm535, %v1101, 0
    %v1123 = vsel %vm535, %v1106, 0
    %v1126 = vsel %vm535, %v1111, 0
    %v1129 = vsel %vm535, %v1116, 0
    %1131 = vmatprep.subr.mxu0 %v84
    %1132 = vmatpush1.msra.mxu0 %v83
    %1133 = vmatprep.subr.mxu0 %v88
    %1134 = vmatpush1.msra.mxu0 %v87
    %1135 = vmatprep.subr.mxu0 0.0
    %1136 = vmatpush1.msra.mxu0 0.0
    %1137 = vmatprep.subr.mxu0 0.0
    %1138 = vmatpush1.msra.mxu0 0.0
    %1139 = vmatprep.subr.mxu0 0.0
    %1140 = vmatpush1.msra.mxu0 0.0
    %1141 = vmatprep.subr.mxu0 0.0
    %1142 = vmatpush1.msra.mxu0 0.0
    %1143 = vmatprep.subr.mxu0 0.0
    %1144 = vmatpush1.msra.mxu0 0.0
    %1145 = vmatprep.subr.mxu0 0.0
    %1146 = vmatpush1.msra.mxu0 0.0
    %1147 = vmatprep.subr.mxu0 0.0
    %1148 = vmatpush1.msra.mxu0 0.0
    %1149 = vmatprep.subr.mxu0 0.0
    %1150 = vmatpush1.msra.mxu0 0.0
    %1151 = vmatprep.subr.mxu0 0.0
    %1152 = vmatpush1.msra.mxu0 0.0
    %1153 = vmatprep.subr.mxu0 0.0
    %1154 = vmatpush1.msra.mxu0 0.0
    %1155 = vmatprep.subr.mxu0 0.0
    %1156 = vmatpush1.msra.mxu0 0.0
    %1157 = vmatprep.subr.mxu0 0.0
    %1158 = vmatpush1.msra.mxu0 0.0
    %1159 = vmatprep.subr.mxu0 0.0
    %1160 = vmatpush1.msra.mxu0 0.0
    %1161 = vmatprep.subr.mxu0 0.0
    %1162 = vmatpush1.msra.mxu0 0.0
    %1163 = vmatprep.subr.mxu0 0.0
    %1164 = vmatpush1.msra.mxu0 0.0
    %1165 = vmatprep.subr.mxu0 0.0
    %1166 = vmatpush1.msra.mxu0 0.0
    %1167 = vmatprep.subr.mxu0 0.0
    %1168 = vmatpush1.msra.mxu0 0.0
    %1169 = vmatprep.subr.mxu0 0.0
    %1170 = vmatpush1.msra.mxu0 0.0
    %1171 = vmatprep.subr.mxu0 0.0
    %1172 = vmatpush1.msra.mxu0 0.0
    %1173 = vmatprep.subr.mxu0 0.0
    %1174 = vmatpush1.msra.mxu0 0.0
    %1175 = vmatprep.subr.mxu0 0.0
    %1176 = vmatpush1.msra.mxu0 0.0
    %1177 = vmatprep.subr.mxu0 0.0
    %1178 = vmatpush1.msra.mxu0 0.0
    %1179 = vmatprep.subr.mxu0 0.0
    %1180 = vmatpush1.msra.mxu0 0.0
    %1181 = vmatprep.subr.mxu0 0.0
    %1182 = vmatpush1.msra.mxu0 0.0
    %1183 = vmatprep.subr.mxu0 0.0
    %1184 = vmatpush1.msra.mxu0 0.0
    %1185 = vmatprep.subr.mxu0 0.0
    %1186 = vmatpush1.msra.mxu0 0.0
    %1187 = vmatprep.subr.mxu0 0.0
    %1188 = vmatpush1.msra.mxu0 0.0
    %1189 = vmatprep.subr.mxu0 0.0
    %1190 = vmatpush1.msra.mxu0 0.0
    %1191 = vmatprep.subr.mxu0 0.0
    %1192 = vmatpush1.msra.mxu0 0.0
    %1193 = vmatprep.subr.mxu0 0.0
    %1194 = vmatpush1.msra.mxu0 0.0
    %1195 = vmatprep.mubr.f32.mxu0 0.0
    %1196 = vmatmul.mubr.f32.gmra.mrb[0].mxu0 %v1120
    %v1197 = vpop.f32.mrb[0].mxu0
    %v1198 = vadd.f32 0.0, %v1197
    %v1199 = vpop.f32.mrb[0].mxu0
    %v1200 = vadd.f32 0.0, %v1199
    %1201 = vmatprep.mubr.f32.mxu0 0.0
    %1202 = vmatmul.mubr.f32.gmra.mrb[0].mxu0 %v1123
    %v1203 = vpop.f32.mrb[0].mxu0
    %v1204 = vadd.f32 0.0, %v1203
    %v1205 = vpop.f32.mrb[0].mxu0
    %v1206 = vadd.f32 0.0, %v1205
    %1207 = vmatprep.mubr.f32.mxu0 0.0
    %1208 = vmatmul.mubr.f32.gmra.mrb[0].mxu0 %v1126
    %v1209 = vpop.f32.mrb[0].mxu0
    %v1210 = vadd.f32 0.0, %v1209
    %v1211 = vpop.f32.mrb[0].mxu0
    %v1212 = vadd.f32 0.0, %v1211
    %1213 = vmatprep.mubr.f32.mxu0 0.0
    %1214 = vmatmul.mubr.f32.gmra.mrb[0].mxu0 %v1129
    %v1215 = vpop.f32.mrb[0].mxu0
    %v1216 = vadd.f32 0.0, %v1215
    %v1217 = vpop.f32.mrb[0].mxu0
    %v1218 = vadd.f32 0.0, %v1217
    %1219 = vdwg.mxu0
    %1220 = vmatprep.subr.mxu0 %v86
    %1221 = vmatpush1.msra.mxu0 %v85
    %1222 = vmatprep.subr.mxu0 %v90
    %1223 = vmatpush1.msra.mxu0 %v89
    %1224 = vmatprep.subr.mxu0 0.0
    %1225 = vmatpush1.msra.mxu0 0.0
    %1226 = vmatprep.subr.mxu0 0.0
    %1227 = vmatpush1.msra.mxu0 0.0
    %1228 = vmatprep.subr.mxu0 0.0
    %1229 = vmatpush1.msra.mxu0 0.0
    %1230 = vmatprep.subr.mxu0 0.0
    %1231 = vmatpush1.msra.mxu0 0.0
    %1232 = vmatprep.subr.mxu0 0.0
    %1233 = vmatpush1.msra.mxu0 0.0
    %1234 = vmatprep.subr.mxu0 0.0
    %1235 = vmatpush1.msra.mxu0 0.0
    %1236 = vmatprep.subr.mxu0 0.0
    %1237 = vmatpush1.msra.mxu0 0.0
    %1238 = vmatprep.subr.mxu0 0.0
    %1239 = vmatpush1.msra.mxu0 0.0
    %1240 = vmatprep.subr.mxu0 0.0
    %1241 = vmatpush1.msra.mxu0 0.0
    %1242 = vmatprep.subr.mxu0 0.0
    %1243 = vmatpush1.msra.mxu0 0.0
    %1244 = vmatprep.subr.mxu0 0.0
    %1245 = vmatpush1.msra.mxu0 0.0
    %1246 = vmatprep.subr.mxu0 0.0
    %1247 = vmatpush1.msra.mxu0 0.0
    %1248 = vmatprep.subr.mxu0 0.0
    %1249 = vmatpush1.msra.mxu0 0.0
    %1250 = vmatprep.subr.mxu0 0.0
    %1251 = vmatpush1.msra.mxu0 0.0
    %1252 = vmatprep.subr.mxu0 0.0
    %1253 = vmatpush1.msra.mxu0 0.0
    %1254 = vmatprep.subr.mxu0 0.0
    %1255 = vmatpush1.msra.mxu0 0.0
    %1256 = vmatprep.subr.mxu0 0.0
    %1257 = vmatpush1.msra.mxu0 0.0
    %1258 = vmatprep.subr.mxu0 0.0
    %1259 = vmatpush1.msra.mxu0 0.0
    %1260 = vmatprep.subr.mxu0 0.0
    %1261 = vmatpush1.msra.mxu0 0.0
    %1262 = vmatprep.subr.mxu0 0.0
    %1263 = vmatpush1.msra.mxu0 0.0
    %1264 = vmatprep.subr.mxu0 0.0
    %1265 = vmatpush1.msra.mxu0 0.0
    %1266 = vmatprep.subr.mxu0 0.0
    %1267 = vmatpush1.msra.mxu0 0.0
    %1268 = vmatprep.subr.mxu0 0.0
    %1269 = vmatpush1.msra.mxu0 0.0
    %1270 = vmatprep.subr.mxu0 0.0
    %1271 = vmatpush1.msra.mxu0 0.0
    %1272 = vmatprep.subr.mxu0 0.0
    %1273 = vmatpush1.msra.mxu0 0.0
    %1274 = vmatprep.subr.mxu0 0.0
    %1275 = vmatpush1.msra.mxu0 0.0
    %1276 = vmatprep.subr.mxu0 0.0
    %1277 = vmatpush1.msra.mxu0 0.0
    %1278 = vmatprep.subr.mxu0 0.0
    %1279 = vmatpush1.msra.mxu0 0.0
    %1280 = vmatprep.subr.mxu0 0.0
    %1281 = vmatpush1.msra.mxu0 0.0
    %1282 = vmatprep.subr.mxu0 0.0
    %1283 = vmatpush1.msra.mxu0 0.0
    %1284 = vmatprep.mubr.f32.mxu0 0.0
    %1285 = vmatmul.mubr.f32.gmra.mrb[0].mxu0 %v1120
    %v1286 = vpop.f32.mrb[0].mxu0
    %v1287 = vadd.f32 0.0, %v1286
    %v1288 = vpop.f32.mrb[0].mxu0
    %v1289 = vadd.f32 0.0, %v1288
    %1290 = vmatprep.mubr.f32.mxu0 0.0
    %1291 = vmatmul.mubr.f32.gmra.mrb[0].mxu0 %v1123
    %v1292 = vpop.f32.mrb[0].mxu0
    %v1293 = vadd.f32 0.0, %v1292
    %v1294 = vpop.f32.mrb[0].mxu0
    %v1295 = vadd.f32 0.0, %v1294
    %1296 = vmatprep.mubr.f32.mxu0 0.0
    %1297 = vmatmul.mubr.f32.gmra.mrb[0].mxu0 %v1126
    %v1298 = vpop.f32.mrb[0].mxu0
    %v1299 = vadd.f32 0.0, %v1298
    %v1300 = vpop.f32.mrb[0].mxu0
    %v1301 = vadd.f32 0.0, %v1300
    %1302 = vmatprep.mubr.f32.mxu0 0.0
    %1303 = vmatmul.mubr.f32.gmra.mrb[0].mxu0 %v1129
    %v1304 = vpop.f32.mrb[0].mxu0
    %v1305 = vadd.f32 0.0, %v1304
    %v1306 = vpop.f32.mrb[0].mxu0
    %v1307 = vadd.f32 0.0, %v1306
    %1308 = vdwg.mxu0
    %v1309 = vmul.f32 %v1198, %v339
    %v1310 = vmul.f32 %v1200, %v341
    %v1311 = vmul.f32 %v1287, %v428
    %v1312 = vmul.f32 %v1289, %v430
    %v1313 = vmul.f32 %v1204, %v345
    %v1314 = vmul.f32 %v1206, %v347
    %v1315 = vmul.f32 %v1293, %v434
    %v1316 = vmul.f32 %v1295, %v436
    %v1317 = vmul.f32 %v1210, %v351
    %v1318 = vmul.f32 %v1212, %v353
    %v1319 = vmul.f32 %v1299, %v440
    %v1320 = vmul.f32 %v1301, %v442
    %v1321 = vmul.f32 %v1216, %v357
    %v1322 = vmul.f32 %v1218, %v359
    %v1323 = vmul.f32 %v1305, %v446
    %v1324 = vmul.f32 %v1307, %v448
    %1325 = vmatprep.subr.mxu0 0.0
    %1326 = vmatpush1.msra.mxu0 %v101
    %1327 = vmatprep.subr.mxu0 0.0
    %1328 = vmatpush1.msra.mxu0 %v102
    %1329 = vmatprep.subr.mxu0 0.0
    %1330 = vmatpush1.msra.mxu0 %v103
    %1331 = vmatprep.subr.mxu0 0.0
    %1332 = vmatpush1.msra.mxu0 %v104
    %1333 = vmatprep.subr.mxu0 0.0
    %1334 = vmatpush1.msra.mxu0 %v105
    %1335 = vmatprep.subr.mxu0 0.0
    %1336 = vmatpush1.msra.mxu0 %v106
    %1337 = vmatprep.subr.mxu0 0.0
    %1338 = vmatpush1.msra.mxu0 %v107
    %1339 = vmatprep.subr.mxu0 0.0
    %1340 = vmatpush1.msra.mxu0 %v108
    %1341 = vmatprep.subr.mxu0 0.0
    %1342 = vmatpush1.msra.mxu0 %v109
    %1343 = vmatprep.subr.mxu0 0.0
    %1344 = vmatpush1.msra.mxu0 %v110
    %1345 = vmatprep.subr.mxu0 0.0
    %1346 = vmatpush1.msra.mxu0 %v111
    %1347 = vmatprep.subr.mxu0 0.0
    %1348 = vmatpush1.msra.mxu0 %v112
    %1349 = vmatprep.subr.mxu0 0.0
    %1350 = vmatpush1.msra.mxu0 %v113
    %1351 = vmatprep.subr.mxu0 0.0
    %1352 = vmatpush1.msra.mxu0 %v114
    %1353 = vmatprep.subr.mxu0 0.0
    %1354 = vmatpush1.msra.mxu0 %v115
    %1355 = vmatprep.subr.mxu0 0.0
    %1356 = vmatpush1.msra.mxu0 %v116
    %1357 = vmatprep.subr.mxu0 0.0
    %1358 = vmatpush1.msra.mxu0 %v117
    %1359 = vmatprep.subr.mxu0 0.0
    %1360 = vmatpush1.msra.mxu0 %v118
    %1361 = vmatprep.subr.mxu0 0.0
    %1362 = vmatpush1.msra.mxu0 %v119
    %1363 = vmatprep.subr.mxu0 0.0
    %1364 = vmatpush1.msra.mxu0 %v120
    %1365 = vmatprep.subr.mxu0 0.0
    %1366 = vmatpush1.msra.mxu0 %v121
    %1367 = vmatprep.subr.mxu0 0.0
    %1368 = vmatpush1.msra.mxu0 %v122
    %1369 = vmatprep.subr.mxu0 0.0
    %1370 = vmatpush1.msra.mxu0 %v123
    %1371 = vmatprep.subr.mxu0 0.0
    %1372 = vmatpush1.msra.mxu0 %v124
    %1373 = vmatprep.subr.mxu0 0.0
    %1374 = vmatpush1.msra.mxu0 %v125
    %1375 = vmatprep.subr.mxu0 0.0
    %1376 = vmatpush1.msra.mxu0 %v126
    %1377 = vmatprep.subr.mxu0 0.0
    %1378 = vmatpush1.msra.mxu0 %v127
    %1379 = vmatprep.subr.mxu0 0.0
    %1380 = vmatpush1.msra.mxu0 %v128
    %1381 = vmatprep.subr.mxu0 0.0
    %1382 = vmatpush1.msra.mxu0 %v129
    %1383 = vmatprep.subr.mxu0 0.0
    %1384 = vmatpush1.msra.mxu0 %v130
    %1385 = vmatprep.subr.mxu0 0.0
    %1386 = vmatpush1.msra.mxu0 %v131
    %1387 = vmatprep.subr.mxu0 0.0
    %1388 = vmatpush1.msra.mxu0 %v132
    %1389 = vmatprep.mubr.f32.mxu0 %v1310
    %1390 = vmatmul.mubr.f32.gmra.mrb[0].mxu0 %v1309
    %v1391 = vpop.f32.mrb[0].mxu0
    %v1392 = vadd.f32 0.0, %v1391
    %v1393 = vpop.f32.mrb[0].mxu0
    %1394 = vmatprep.mubr.f32.mxu0 %v1314
    %1395 = vmatmul.mubr.f32.gmra.mrb[0].mxu0 %v1313
    %v1396 = vpop.f32.mrb[0].mxu0
    %v1397 = vadd.f32 0.0, %v1396
    %v1398 = vpop.f32.mrb[0].mxu0
    %1399 = vmatprep.mubr.f32.mxu0 %v1318
    %1400 = vmatmul.mubr.f32.gmra.mrb[0].mxu0 %v1317
    %v1401 = vpop.f32.mrb[0].mxu0
    %v1402 = vadd.f32 0.0, %v1401
    %v1403 = vpop.f32.mrb[0].mxu0
    %1404 = vmatprep.mubr.f32.mxu0 %v1322
    %1405 = vmatmul.mubr.f32.gmra.mrb[0].mxu0 %v1321
    %v1406 = vpop.f32.mrb[0].mxu0
    %v1407 = vadd.f32 0.0, %v1406
    %v1408 = vpop.f32.mrb[0].mxu0
    %1409 = vdwg.mxu0
    %1410 = vmatprep.subr.mxu0 0.0
    %1411 = vmatpush1.msra.mxu0 %v133
    %1412 = vmatprep.subr.mxu0 0.0
    %1413 = vmatpush1.msra.mxu0 %v134
    %1414 = vmatprep.subr.mxu0 0.0
    %1415 = vmatpush1.msra.mxu0 %v135
    %1416 = vmatprep.subr.mxu0 0.0
    %1417 = vmatpush1.msra.mxu0 %v136
    %1418 = vmatprep.subr.mxu0 0.0
    %1419 = vmatpush1.msra.mxu0 %v137
    %1420 = vmatprep.subr.mxu0 0.0
    %1421 = vmatpush1.msra.mxu0 %v138
    %1422 = vmatprep.subr.mxu0 0.0
    %1423 = vmatpush1.msra.mxu0 %v139
    %1424 = vmatprep.subr.mxu0 0.0
    %1425 = vmatpush1.msra.mxu0 %v140
    %1426 = vmatprep.subr.mxu0 0.0
    %1427 = vmatpush1.msra.mxu0 %v141
    %1428 = vmatprep.subr.mxu0 0.0
    %1429 = vmatpush1.msra.mxu0 %v142
    %1430 = vmatprep.subr.mxu0 0.0
    %1431 = vmatpush1.msra.mxu0 %v143
    %1432 = vmatprep.subr.mxu0 0.0
    %1433 = vmatpush1.msra.mxu0 %v144
    %1434 = vmatprep.subr.mxu0 0.0
    %1435 = vmatpush1.msra.mxu0 %v145
    %1436 = vmatprep.subr.mxu0 0.0
    %1437 = vmatpush1.msra.mxu0 %v146
    %1438 = vmatprep.subr.mxu0 0.0
    %1439 = vmatpush1.msra.mxu0 %v147
    %1440 = vmatprep.subr.mxu0 0.0
    %1441 = vmatpush1.msra.mxu0 %v148
    %1442 = vmatprep.subr.mxu0 0.0
    %1443 = vmatpush1.msra.mxu0 %v149
    %1444 = vmatprep.subr.mxu0 0.0
    %1445 = vmatpush1.msra.mxu0 %v150
    %1446 = vmatprep.subr.mxu0 0.0
    %1447 = vmatpush1.msra.mxu0 %v151
    %1448 = vmatprep.subr.mxu0 0.0
    %1449 = vmatpush1.msra.mxu0 %v152
    %1450 = vmatprep.subr.mxu0 0.0
    %1451 = vmatpush1.msra.mxu0 %v153
    %1452 = vmatprep.subr.mxu0 0.0
    %1453 = vmatpush1.msra.mxu0 %v154
    %1454 = vmatprep.subr.mxu0 0.0
    %1455 = vmatpush1.msra.mxu0 %v155
    %1456 = vmatprep.subr.mxu0 0.0
    %1457 = vmatpush1.msra.mxu0 %v156
    %1458 = vmatprep.subr.mxu0 0.0
    %1459 = vmatpush1.msra.mxu0 %v157
    %1460 = vmatprep.subr.mxu0 0.0
    %1461 = vmatpush1.msra.mxu0 %v158
    %1462 = vmatprep.subr.mxu0 0.0
    %1463 = vmatpush1.msra.mxu0 %v159
    %1464 = vmatprep.subr.mxu0 0.0
    %1465 = vmatpush1.msra.mxu0 %v160
    %1466 = vmatprep.subr.mxu0 0.0
    %1467 = vmatpush1.msra.mxu0 %v161
    %1468 = vmatprep.subr.mxu0 0.0
    %1469 = vmatpush1.msra.mxu0 %v162
    %1470 = vmatprep.subr.mxu0 0.0
    %1471 = vmatpush1.msra.mxu0 %v163
    %1472 = vmatprep.subr.mxu0 0.0
    %1473 = vmatpush1.msra.mxu0 %v164
    %1474 = vmatprep.mubr.f32.mxu0 %v1312
    %1475 = vmatmul.mubr.f32.gmra.mrb[0].mxu0 %v1311
    %v1476 = vpop.f32.mrb[0].mxu0
    %v1477 = vadd.f32 %v1392, %v1476
    %v1478 = vpop.f32.mrb[0].mxu0
    %1479 = vmatprep.mubr.f32.mxu0 %v1316
    %1480 = vmatmul.mubr.f32.gmra.mrb[0].mxu0 %v1315
    %v1481 = vpop.f32.mrb[0].mxu0
    %v1482 = vadd.f32 %v1397, %v1481
    %v1483 = vpop.f32.mrb[0].mxu0
    %1484 = vmatprep.mubr.f32.mxu0 %v1320
    %1485 = vmatmul.mubr.f32.gmra.mrb[0].mxu0 %v1319
    %v1486 = vpop.f32.mrb[0].mxu0
    %v1487 = vadd.f32 %v1402, %v1486
    %v1488 = vpop.f32.mrb[0].mxu0
    %1489 = vmatprep.mubr.f32.mxu0 %v1324
    %1490 = vmatmul.mubr.f32.gmra.mrb[0].mxu0 %v1323
    %v1491 = vpop.f32.mrb[0].mxu0
    %v1492 = vadd.f32 %v1407, %v1491
    %v1493 = vpop.f32.mrb[0].mxu0
    %1494 = vdwg.mxu0
    %1495 = vmatprep.subr.mxu0 0.0
    %1496 = vmatpush1.msra.mxu0 %v1477
    %1497 = vmatprep.subr.mxu0 0.0
    %1498 = vmatpush1.msra.mxu0 %v1482
    %1499 = vmatprep.subr.mxu0 0.0
    %1500 = vmatpush1.msra.mxu0 %v1487
    %1501 = vmatprep.subr.mxu0 0.0
    %1502 = vmatpush1.msra.mxu0 %v1492
    %1503 = vmatprep.subr.mxu0 0.0
    %1504 = vmatpush1.msra.mxu0 0.0
    %1505 = vmatprep.subr.mxu0 0.0
    %1506 = vmatpush1.msra.mxu0 0.0
    %1507 = vmatprep.subr.mxu0 0.0
    %1508 = vmatpush1.msra.mxu0 0.0
    %1509 = vmatprep.subr.mxu0 0.0
    %1510 = vmatpush1.msra.mxu0 0.0
    %1511 = vmatprep.subr.mxu0 0.0
    %1512 = vmatpush1.msra.mxu0 0.0
    %1513 = vmatprep.subr.mxu0 0.0
    %1514 = vmatpush1.msra.mxu0 0.0
    %1515 = vmatprep.subr.mxu0 0.0
    %1516 = vmatpush1.msra.mxu0 0.0
    %1517 = vmatprep.subr.mxu0 0.0
    %1518 = vmatpush1.msra.mxu0 0.0
    %1519 = vmatprep.subr.mxu0 0.0
    %1520 = vmatpush1.msra.mxu0 0.0
    %1521 = vmatprep.subr.mxu0 0.0
    %1522 = vmatpush1.msra.mxu0 0.0
    %1523 = vmatprep.subr.mxu0 0.0
    %1524 = vmatpush1.msra.mxu0 0.0
    %1525 = vmatprep.subr.mxu0 0.0
    %1526 = vmatpush1.msra.mxu0 0.0
    %1527 = vmatprep.subr.mxu0 0.0
    %1528 = vmatpush1.msra.mxu0 0.0
    %1529 = vmatprep.subr.mxu0 0.0
    %1530 = vmatpush1.msra.mxu0 0.0
    %1531 = vmatprep.subr.mxu0 0.0
    %1532 = vmatpush1.msra.mxu0 0.0
    %1533 = vmatprep.subr.mxu0 0.0
    %1534 = vmatpush1.msra.mxu0 0.0
    %1535 = vmatprep.subr.mxu0 0.0
    %1536 = vmatpush1.msra.mxu0 0.0
    %1537 = vmatprep.subr.mxu0 0.0
    %1538 = vmatpush1.msra.mxu0 0.0
    %1539 = vmatprep.subr.mxu0 0.0
    %1540 = vmatpush1.msra.mxu0 0.0
    %1541 = vmatprep.subr.mxu0 0.0
    %1542 = vmatpush1.msra.mxu0 0.0
    %1543 = vmatprep.subr.mxu0 0.0
    %1544 = vmatpush1.msra.mxu0 0.0
    %1545 = vmatprep.subr.mxu0 0.0
    %1546 = vmatpush1.msra.mxu0 0.0
    %1547 = vmatprep.subr.mxu0 0.0
    %1548 = vmatpush1.msra.mxu0 0.0
    %1549 = vmatprep.subr.mxu0 0.0
    %1550 = vmatpush1.msra.mxu0 0.0
    %1551 = vmatprep.subr.mxu0 0.0
    %1552 = vmatpush1.msra.mxu0 0.0
    %1553 = vmatprep.subr.mxu0 0.0
    %1554 = vmatpush1.msra.mxu0 0.0
    %1555 = vmatprep.subr.mxu0 0.0
    %1556 = vmatpush1.msra.mxu0 0.0
    %1557 = vmatprep.subr.mxu0 0.0
    %1558 = vmatpush1.msra.mxu0 0.0
    %1559 = vmatprep.mubr.f32.mxu0 0.0
    %1560 = vmatmul.mubr.f32.gmra.mrb[0].mxu0 %v838
    %v1561 = vpop.f32.mrb[0].mxu0
    %v1562 = vadd.f32 0.0, %v1561
    %v1563 = vpop.f32.mrb[0].mxu0
    %1564 = vmatprep.mubr.f32.mxu0 0.0
    %1565 = vmatmul.mubr.f32.gmra.mrb[0].mxu0 %v841
    %v1566 = vpop.f32.mrb[0].mxu0
    %v1567 = vadd.f32 0.0, %v1566
    %v1568 = vpop.f32.mrb[0].mxu0
    %1569 = vdwg.mxu0
    %v1570 = vmul.f32 %v921, %v1562
    %v1571 = vmul.f32 %v926, %v1567
    %v1573 = vsel %vm535, %v1032, 0
    %v1576 = vsel %vm535, %v1033, 0
    %1578 = vmatprep.subr.mxu0 0.0
    %1579 = vmatpush1.msra.mxu0 %v165
    %1580 = vmatprep.subr.mxu0 0.0
    %1581 = vmatpush1.msra.mxu0 %v166
    %1582 = vmatprep.subr.mxu0 0.0
    %1583 = vmatpush1.msra.mxu0 0.0
    %1584 = vmatprep.subr.mxu0 0.0
    %1585 = vmatpush1.msra.mxu0 0.0
    %1586 = vmatprep.subr.mxu0 0.0
    %1587 = vmatpush1.msra.mxu0 0.0
    %1588 = vmatprep.subr.mxu0 0.0
    %1589 = vmatpush1.msra.mxu0 0.0
    %1590 = vmatprep.subr.mxu0 0.0
    %1591 = vmatpush1.msra.mxu0 0.0
    %1592 = vmatprep.subr.mxu0 0.0
    %1593 = vmatpush1.msra.mxu0 0.0
    %1594 = vmatprep.subr.mxu0 0.0
    %1595 = vmatpush1.msra.mxu0 0.0
    %1596 = vmatprep.subr.mxu0 0.0
    %1597 = vmatpush1.msra.mxu0 0.0
    %1598 = vmatprep.subr.mxu0 0.0
    %1599 = vmatpush1.msra.mxu0 0.0
    %1600 = vmatprep.subr.mxu0 0.0
    %1601 = vmatpush1.msra.mxu0 0.0
    %1602 = vmatprep.subr.mxu0 0.0
    %1603 = vmatpush1.msra.mxu0 0.0
    %1604 = vmatprep.subr.mxu0 0.0
    %1605 = vmatpush1.msra.mxu0 0.0
    %1606 = vmatprep.subr.mxu0 0.0
    %1607 = vmatpush1.msra.mxu0 0.0
    %1608 = vmatprep.subr.mxu0 0.0
    %1609 = vmatpush1.msra.mxu0 0.0
    %1610 = vmatprep.subr.mxu0 0.0
    %1611 = vmatpush1.msra.mxu0 0.0
    %1612 = vmatprep.subr.mxu0 0.0
    %1613 = vmatpush1.msra.mxu0 0.0
    %1614 = vmatprep.subr.mxu0 0.0
    %1615 = vmatpush1.msra.mxu0 0.0
    %1616 = vmatprep.subr.mxu0 0.0
    %1617 = vmatpush1.msra.mxu0 0.0
    %1618 = vmatprep.subr.mxu0 0.0
    %1619 = vmatpush1.msra.mxu0 0.0
    %1620 = vmatprep.subr.mxu0 0.0
    %1621 = vmatpush1.msra.mxu0 0.0
    %1622 = vmatprep.subr.mxu0 0.0
    %1623 = vmatpush1.msra.mxu0 0.0
    %1624 = vmatprep.subr.mxu0 0.0
    %1625 = vmatpush1.msra.mxu0 0.0
    %1626 = vmatprep.subr.mxu0 0.0
    %1627 = vmatpush1.msra.mxu0 0.0
    %1628 = vmatprep.subr.mxu0 0.0
    %1629 = vmatpush1.msra.mxu0 0.0
    %1630 = vmatprep.subr.mxu0 0.0
    %1631 = vmatpush1.msra.mxu0 0.0
    %1632 = vmatprep.subr.mxu0 0.0
    %1633 = vmatpush1.msra.mxu0 0.0
    %1634 = vmatprep.subr.mxu0 0.0
    %1635 = vmatpush1.msra.mxu0 0.0
    %1636 = vmatprep.subr.mxu0 0.0
    %1637 = vmatpush1.msra.mxu0 0.0
    %1638 = vmatprep.subr.mxu0 0.0
    %1639 = vmatpush1.msra.mxu0 0.0
    %1640 = vmatprep.subr.mxu0 0.0
    %1641 = vmatpush1.msra.mxu0 0.0
    %1642 = vmatprep.mubr.f32.mxu0 0.0
    %1643 = vmatmul.mubr.f32.gmra.mrb[0].mxu0 %v1573
    %v1644 = vpop.f32.mrb[0].mxu0
    %v1645 = vadd.f32 0.0, %v1644
    %v1646 = vpop.f32.mrb[0].mxu0
    %1647 = vmatprep.mubr.f32.mxu0 0.0
    %1648 = vmatmul.mubr.f32.gmra.mrb[0].mxu0 %v1576
    %v1649 = vpop.f32.mrb[0].mxu0
    %v1650 = vadd.f32 0.0, %v1649
    %v1651 = vpop.f32.mrb[0].mxu0
    %1652 = vdwg.mxu0
    %v1653 = vadd.f32 %v1570, %v1645
    %v1654 = vadd.f32 %v1571, %v1650
    %v1655 = vlaneseq
    %v1656 = vshrl.u32 %v1655, 7
    %v1657 = vsub.s32 0, %v1656
    %v1658 = vrot.slane %v167, %v1657
    %v1659 = vadd.f32 %v1653, %v1658
    %v1660 = vadd.f32 %v1654, %v1658
    %vm1661 = vcmp.gt.f32.partialorder %v1659, 0.0
    %vm1662 = vcmp.gt.f32.partialorder %v1660, 0.0
    %v1663 = vmin.f32 %v1659, 0.0
    %v1664 = vmin.f32 %v1660, 0.0
    %v1665 = vmul.f32 %v1663, 1.442695
    %v1666 = vpow.pop %v1665
    %v1667 = vmul.f32 %v1664, 1.442695
    %v1668 = vpow.pop %v1667
    %v1669 = vsub.f32 %v1666, 1.0
    %v1670 = vsub.f32 %v1668, 1.0
    %v1671 = vsel %vm1661, %v1659, %v1669
    %v1672 = vsel %vm1662, %v1660, %v1670
    %v1674 = vsel %vm535, %v51, 0
    %1676 = vmatprep.subr.mxu0 0.0
    %1677 = vmatpush1.msra.mxu0 %v1671
    %1678 = vmatprep.subr.mxu0 0.0
    %1679 = vmatpush1.msra.mxu0 %v1672
    %1680 = vmatprep.subr.mxu0 0.0
    %1681 = vmatpush1.msra.mxu0 0.0
    %1682 = vmatprep.subr.mxu0 0.0
    %1683 = vmatpush1.msra.mxu0 0.0
    %1684 = vmatprep.subr.mxu0 0.0
    %1685 = vmatpush1.msra.mxu0 0.0
    %1686 = vmatprep.subr.mxu0 0.0
    %1687 = vmatpush1.msra.mxu0 0.0
    %1688 = vmatprep.subr.mxu0 0.0
    %1689 = vmatpush1.msra.mxu0 0.0
    %1690 = vmatprep.subr.mxu0 0.0
    %1691 = vmatpush1.msra.mxu0 0.0
    %1692 = vmatprep.subr.mxu0 0.0
    %1693 = vmatpush1.msra.mxu0 0.0
    %1694 = vmatprep.subr.mxu0 0.0
    %1695 = vmatpush1.msra.mxu0 0.0
    %1696 = vmatprep.subr.mxu0 0.0
    %1697 = vmatpush1.msra.mxu0 0.0
    %1698 = vmatprep.subr.mxu0 0.0
    %1699 = vmatpush1.msra.mxu0 0.0
    %1700 = vmatprep.subr.mxu0 0.0
    %1701 = vmatpush1.msra.mxu0 0.0
    %1702 = vmatprep.subr.mxu0 0.0
    %1703 = vmatpush1.msra.mxu0 0.0
    %1704 = vmatprep.subr.mxu0 0.0
    %1705 = vmatpush1.msra.mxu0 0.0
    %1706 = vmatprep.subr.mxu0 0.0
    %1707 = vmatpush1.msra.mxu0 0.0
    %1708 = vmatprep.subr.mxu0 0.0
    %1709 = vmatpush1.msra.mxu0 0.0
    %1710 = vmatprep.subr.mxu0 0.0
    %1711 = vmatpush1.msra.mxu0 0.0
    %1712 = vmatprep.subr.mxu0 0.0
    %1713 = vmatpush1.msra.mxu0 0.0
    %1714 = vmatprep.subr.mxu0 0.0
    %1715 = vmatpush1.msra.mxu0 0.0
    %1716 = vmatprep.subr.mxu0 0.0
    %1717 = vmatpush1.msra.mxu0 0.0
    %1718 = vmatprep.subr.mxu0 0.0
    %1719 = vmatpush1.msra.mxu0 0.0
    %1720 = vmatprep.subr.mxu0 0.0
    %1721 = vmatpush1.msra.mxu0 0.0
    %1722 = vmatprep.subr.mxu0 0.0
    %1723 = vmatpush1.msra.mxu0 0.0
    %1724 = vmatprep.subr.mxu0 0.0
    %1725 = vmatpush1.msra.mxu0 0.0
    %1726 = vmatprep.subr.mxu0 0.0
    %1727 = vmatpush1.msra.mxu0 0.0
    %1728 = vmatprep.subr.mxu0 0.0
    %1729 = vmatpush1.msra.mxu0 0.0
    %1730 = vmatprep.subr.mxu0 0.0
    %1731 = vmatpush1.msra.mxu0 0.0
    %1732 = vmatprep.subr.mxu0 0.0
    %1733 = vmatpush1.msra.mxu0 0.0
    %1734 = vmatprep.subr.mxu0 0.0
    %1735 = vmatpush1.msra.mxu0 0.0
    %1736 = vmatprep.subr.mxu0 0.0
    %1737 = vmatpush1.msra.mxu0 0.0
    %1738 = vmatprep.subr.mxu0 0.0
    %1739 = vmatpush1.msra.mxu0 0.0
    %1740 = vmatprep.mubr.f32.mxu0 0.0
    %1741 = vmatmul.mubr.f32.gmra.mrb[0].mxu0 %v1674
    %v1742 = vpop.f32.mrb[0].mxu0
    %v1743 = vadd.f32 0.0, %v1742
    %v1744 = vpop.f32.mrb[0].mxu0
    %1745 = vdwg.mxu0
    %1747 = vset.pattern.permute.xlu0 0
    %1748 = vperm.xlu0 %1747, %v41
    %v1749 = vpop.permute.xlu0 %1748
    %v1751 = vmul.f32 %v1749, %v1743
    %v1752 = vlaneseq
    %v1753 = vshrl.u32 %v1752, 7
    %v1754 = vsub.s32 0, %v1753
    %v1755 = vrot.slane %v61, %v1754
    %v1757 = vsel %vm836, %v1751, 0
    %1759 = vmatprep.subr.mxu0 0.0
    %1760 = vmatpush1.msra.mxu0 %v56
    %1761 = vmatprep.subr.mxu0 0.0
    %1762 = vmatpush1.msra.mxu0 %v57
    %1763 = vmatprep.subr.mxu0 0.0
    %1764 = vmatpush1.msra.mxu0 %v58
    %1765 = vmatprep.subr.mxu0 0.0
    %1766 = vmatpush1.msra.mxu0 %v59
    %1767 = vmatprep.subr.mxu0 0.0
    %1768 = vmatpush1.msra.mxu0 0.0
    %1769 = vmatprep.subr.mxu0 0.0
    %1770 = vmatpush1.msra.mxu0 0.0
    %1771 = vmatprep.subr.mxu0 0.0
    %1772 = vmatpush1.msra.mxu0 0.0
    %1773 = vmatprep.subr.mxu0 0.0
    %1774 = vmatpush1.msra.mxu0 0.0
    %1775 = vmatprep.subr.mxu0 0.0
    %1776 = vmatpush1.msra.mxu0 0.0
    %1777 = vmatprep.subr.mxu0 0.0
    %1778 = vmatpush1.msra.mxu0 0.0
    %1779 = vmatprep.subr.mxu0 0.0
    %1780 = vmatpush1.msra.mxu0 0.0
    %1781 = vmatprep.subr.mxu0 0.0
    %1782 = vmatpush1.msra.mxu0 0.0
    %1783 = vmatprep.subr.mxu0 0.0
    %1784 = vmatpush1.msra.mxu0 0.0
    %1785 = vmatprep.subr.mxu0 0.0
    %1786 = vmatpush1.msra.mxu0 0.0
    %1787 = vmatprep.subr.mxu0 0.0
    %1788 = vmatpush1.msra.mxu0 0.0
    %1789 = vmatprep.subr.mxu0 0.0
    %1790 = vmatpush1.msra.mxu0 0.0
    %1791 = vmatprep.subr.mxu0 0.0
    %1792 = vmatpush1.msra.mxu0 0.0
    %1793 = vmatprep.subr.mxu0 0.0
    %1794 = vmatpush1.msra.mxu0 0.0
    %1795 = vmatprep.subr.mxu0 0.0
    %1796 = vmatpush1.msra.mxu0 0.0
    %1797 = vmatprep.subr.mxu0 0.0
    %1798 = vmatpush1.msra.mxu0 0.0
    %1799 = vmatprep.subr.mxu0 0.0
    %1800 = vmatpush1.msra.mxu0 0.0
    %1801 = vmatprep.subr.mxu0 0.0
    %1802 = vmatpush1.msra.mxu0 0.0
    %1803 = vmatprep.subr.mxu0 0.0
    %1804 = vmatpush1.msra.mxu0 0.0
    %1805 = vmatprep.subr.mxu0 0.0
    %1806 = vmatpush1.msra.mxu0 0.0
    %1807 = vmatprep.subr.mxu0 0.0
    %1808 = vmatpush1.msra.mxu0 0.0
    %1809 = vmatprep.subr.mxu0 0.0
    %1810 = vmatpush1.msra.mxu0 0.0
    %1811 = vmatprep.subr.mxu0 0.0
    %1812 = vmatpush1.msra.mxu0 0.0
    %1813 = vmatprep.subr.mxu0 0.0
    %1814 = vmatpush1.msra.mxu0 0.0
    %1815 = vmatprep.subr.mxu0 0.0
    %1816 = vmatpush1.msra.mxu0 0.0
    %1817 = vmatprep.subr.mxu0 0.0
    %1818 = vmatpush1.msra.mxu0 0.0
    %1819 = vmatprep.subr.mxu0 0.0
    %1820 = vmatpush1.msra.mxu0 0.0
    %1821 = vmatprep.subr.mxu0 0.0
    %1822 = vmatpush1.msra.mxu0 0.0
    %1823 = vmatprep.mubr.f32.mxu0 0.0
    %1824 = vmatmul.mubr.f32.gmra.mrb[0].mxu0 %v1757
    %v1825 = vpop.f32.mrb[0].mxu0
    %v1826 = vadd.f32 %v1755, %v1825
    %v1827 = vpop.f32.mrb[0].mxu0
    %1828 = vdwg.mxu0
    %vm1829 = vcmp.gt.f32.partialorder %v1826, 0.0
    %v1830 = vmin.f32 %v1826, 0.0
    %v1831 = vmul.f32 %v1830, 1.442695
    %v1832 = vpow.pop %v1831
    %v1833 = vsub.f32 %v1832, 1.0
    %v1834 = vsel %vm1829, %v1826, %v1833
    %v1835 = vlaneseq
    %v1836 = vshrl.u32 %v1835, 7
    %v1837 = vsub.s32 0, %v1836
    %v1838 = vrot.slane %v176, %v1837
    %v1840 = vsel %vm738, %v1834, 0
    %1842 = vmatprep.subr.mxu0 0.0
    %1843 = vmatpush1.msra.mxu0 %v168
    %1844 = vmatprep.subr.mxu0 0.0
    %1845 = vmatpush1.msra.mxu0 %v169
    %1846 = vmatprep.subr.mxu0 0.0
    %1847 = vmatpush1.msra.mxu0 %v170
    %1848 = vmatprep.subr.mxu0 0.0
    %1849 = vmatpush1.msra.mxu0 %v171
    %1850 = vmatprep.subr.mxu0 0.0
    %1851 = vmatpush1.msra.mxu0 %v172
    %1852 = vmatprep.subr.mxu0 0.0
    %1853 = vmatpush1.msra.mxu0 %v173
    %1854 = vmatprep.subr.mxu0 0.0
    %1855 = vmatpush1.msra.mxu0 %v174
    %1856 = vmatprep.subr.mxu0 0.0
    %1857 = vmatpush1.msra.mxu0 %v175
    %1858 = vmatprep.subr.mxu0 0.0
    %1859 = vmatpush1.msra.mxu0 0.0
    %1860 = vmatprep.subr.mxu0 0.0
    %1861 = vmatpush1.msra.mxu0 0.0
    %1862 = vmatprep.subr.mxu0 0.0
    %1863 = vmatpush1.msra.mxu0 0.0
    %1864 = vmatprep.subr.mxu0 0.0
    %1865 = vmatpush1.msra.mxu0 0.0
    %1866 = vmatprep.subr.mxu0 0.0
    %1867 = vmatpush1.msra.mxu0 0.0
    %1868 = vmatprep.subr.mxu0 0.0
    %1869 = vmatpush1.msra.mxu0 0.0
    %1870 = vmatprep.subr.mxu0 0.0
    %1871 = vmatpush1.msra.mxu0 0.0
    %1872 = vmatprep.subr.mxu0 0.0
    %1873 = vmatpush1.msra.mxu0 0.0
    %1874 = vmatprep.subr.mxu0 0.0
    %1875 = vmatpush1.msra.mxu0 0.0
    %1876 = vmatprep.subr.mxu0 0.0
    %1877 = vmatpush1.msra.mxu0 0.0
    %1878 = vmatprep.subr.mxu0 0.0
    %1879 = vmatpush1.msra.mxu0 0.0
    %1880 = vmatprep.subr.mxu0 0.0
    %1881 = vmatpush1.msra.mxu0 0.0
    %1882 = vmatprep.subr.mxu0 0.0
    %1883 = vmatpush1.msra.mxu0 0.0
    %1884 = vmatprep.subr.mxu0 0.0
    %1885 = vmatpush1.msra.mxu0 0.0
    %1886 = vmatprep.subr.mxu0 0.0
    %1887 = vmatpush1.msra.mxu0 0.0
    %1888 = vmatprep.subr.mxu0 0.0
    %1889 = vmatpush1.msra.mxu0 0.0
    %1890 = vmatprep.subr.mxu0 0.0
    %1891 = vmatpush1.msra.mxu0 0.0
    %1892 = vmatprep.subr.mxu0 0.0
    %1893 = vmatpush1.msra.mxu0 0.0
    %1894 = vmatprep.subr.mxu0 0.0
    %1895 = vmatpush1.msra.mxu0 0.0
    %1896 = vmatprep.subr.mxu0 0.0
    %1897 = vmatpush1.msra.mxu0 0.0
    %1898 = vmatprep.subr.mxu0 0.0
    %1899 = vmatpush1.msra.mxu0 0.0
    %1900 = vmatprep.subr.mxu0 0.0
    %1901 = vmatpush1.msra.mxu0 0.0
    %1902 = vmatprep.subr.mxu0 0.0
    %1903 = vmatpush1.msra.mxu0 0.0
    %1904 = vmatprep.subr.mxu0 0.0
    %1905 = vmatpush1.msra.mxu0 0.0
    %1906 = vmatprep.mubr.f32.mxu0 0.0
    %1907 = vmatmul.mubr.f32.gmra.mrb[0].mxu0 %v1840
    %v1908 = vpop.f32.mrb[0].mxu0
    %v1909 = vadd.f32 %v1838, %v1908
    %v1910 = vpop.f32.mrb[0].mxu0
    %1911 = vdwg.mxu0
    %vm1912 = vcmask 17408
    %v1913 = vsel %vm1912, %v1909, -inf
    %1914 = vmax.xlane.f32.xlu0 %v1913
    %v1915 = vpop.xlane.xlu0 %1914
    %v1916 = vsub.f32 %v1909, %v1915
    %v1917 = vmul.f32 %v1916, 1.442695
    %v1918 = vpow.pop %v1917
    %v1919 = vsel %vm1912, %v1918, 0.0
    %1920 = vadd.xlane.f32.xlu0 %v1919
    %v1921 = vpop.xlane.xlu0 %1920
    %v1922 = vlog2.pop %v1921
    %v1923 = vmul.f32 %v1922, 0.6931472
    %v1924 = vsub.f32 %v1916, %v1923
    %1925 = vst.msk [vmem:[#allocation2] sm:$0x3] %vm1912, %v1924
    // Predicated region
    $region38: #{tpu_custom_call.1} parent=1 // pred_check
      _
    $region39: #{tpu_custom_call.1} parent=1 // pred_check_branch
      %1927 = sbr.rel (0) target = $region41
    $region40: #{tpu_custom_call.1} parent=1 // pred_region
      %s1929 = ssub.s32 32, 32
      %1930 = vsyncadd [#allocation3], %s1929
      %s1932 = sshll.u32 [#allocation2], 4
      %s1933 = int_to_ptr.vmem [resolvable:$true] %s1932
      %1935 = dma.vmem_to_hbm [thread:$0]  %s1933, 32, %s9, [#allocation3]
    $region41: #{tpu_custom_call.1} parent=1 // pred_fallthru
      _
    // Predicated region
    $region42: #{tpu_custom_call.1} parent=1 // pred_check
      _
    $region43: #{tpu_custom_call.1} parent=1 // pred_check_branch
      %1937 = sbr.rel (0) target = $region45
    $region44: #{tpu_custom_call.1} parent=1 // pred_region
      %1938 = dma.done [#allocation3], 32
    $region45: #{tpu_custom_call.1} parent=1 // pred_fallthru
      _
    %1939 = vsyncpa [#allocation3], 1

</llo_original>
